<compile_context>
chip_gen: v7x
topology: tpu7x:2x2x1
jax: 0.10.0
libtpu: 0.0.40
codegen_flags: <defaults>
</compile_context>

<pallas_src>
import functools
import math

import jax
import jax.numpy as jnp
from jax.experimental import pallas as pl
from jax.experimental.pallas import tpu as pltpu

HIDDEN = 32
NUM_HEADS = 4
HEAD_DIM = HIDDEN // NUM_HEADS
MLP_HIDDEN = int(HIDDEN * 4.0)
EPS = 1e-6


def _layernorm(x):
    mean = jnp.mean(x, axis=-1, keepdims=True)
    var = jnp.mean((x - mean) ** 2, axis=-1, keepdims=True)
    return (x - mean) * jax.lax.rsqrt(var + EPS)


def _gelu_tanh(x):
    k = math.sqrt(2.0 / math.pi)
    return 0.5 * x * (1.0 + jnp.tanh(k * (x + 0.044715 * x * x * x)))


def dit_block_kernel(x_ref, c_ref,
                     w_ada_ref, b_ada_ref,
                     w_q_ref, b_q_ref,
                     w_k_ref, b_k_ref,
                     w_v_ref, b_v_ref,
                     w_out_ref, b_out_ref,
                     w1_ref, b1_ref,
                     w2_ref, b2_ref,
                     o_ref,
                     *, num_heads):
    f32 = jnp.float32
    bf16 = jnp.bfloat16

    x = x_ref[0].astype(f32)        # (A, H): one attention-batch column b
    c = c_ref[...].astype(f32)      # (A, H): conditioning, shared across b
    A, H = x.shape

    # ---- adaLN-Zero modulation: SiLU -> six Linear(H, H) chunks ----
    # Six separate K=H dots because H=32 < 128 (keeps the modulation outputs
    # whole-vreg; fuse into one (A, 6H) matmul only when H >= 128).
    # Recomputed per b (B is tiny); for large B hoist into its own call.
    c_silu = (c * jax.nn.sigmoid(c)).astype(bf16)

    def ada(i):
        return (jnp.dot(c_silu, w_ada_ref[i], preferred_element_type=f32)
                + b_ada_ref[i])

    shift_msa, scale_msa, gate_msa = ada(0), ada(1), ada(2)
    shift_mlp, scale_mlp, gate_mlp = ada(3), ada(4), ada(5)

    # ---- attention branch (elementwise math stays f32; matmul operands bf16) ----
    z = _layernorm(x) * (1.0 + scale_msa) + shift_msa             # (A, H) f32
    zb = jnp.broadcast_to(z.astype(bf16), (num_heads, A, H))      # (N, A, H)

    # Head-batched projections straight from head-major weight slabs (N, H, D):
    # no sub-128-lane activation slicing / stacking.  The softmax scale is
    # already folded into w_q / b_q in prepare_params.
    q_h = jnp.einsum('nah,nhd->nad', zb, w_q_ref[...],
                     preferred_element_type=f32) + b_q_ref[...]
    k_h = jnp.einsum('nah,nhd->nad', zb, w_k_ref[...],
                     preferred_element_type=f32) + b_k_ref[...]
    v_h = jnp.einsum('nah,nhd->nad', zb, w_v_ref[...],
                     preferred_element_type=f32) + b_v_ref[...]

    # Full A x A attention per head for this batch column (no mask needed).
    # TODO(synk): at production A, tile the key axis flash-style (online softmax).
    s = jnp.einsum('nad,nkd->nak', q_h.astype(bf16), k_h.astype(bf16),
                   preferred_element_type=f32)                    # (N, A, A)
    s_max = jnp.max(s, axis=-1, keepdims=True)
    e = jnp.exp(s - s_max)
    denom = jnp.sum(e, axis=-1, keepdims=True)
    p_attn = e * pl.reciprocal(denom, approx=True)                # EUP divide

    o_h = jnp.einsum('nak,nkd->nad', p_attn.astype(bf16), v_h.astype(bf16),
                     preferred_element_type=f32)                  # (N, A, D)

    # Concatenate heads on the lane axis (lane-aligned and free at production
    # head_dim) and do the output projection as ONE K=H 2-D matmul: the head
    # reduction happens inside the MXU accumulator -- no (N, A, H) intermediate,
    # no cross-vreg sum over heads.
    o_cat = jnp.concatenate([o_h[n] for n in range(num_heads)], axis=-1)  # (A, H)
    attn = jnp.dot(o_cat.astype(bf16), w_out_ref[...],
                   preferred_element_type=f32) + b_out_ref[...]
    x = x + gate_msa * attn

    # ---- MLP branch (PointFF; dropout p=0 is identity) ----
    z2 = _layernorm(x) * (1.0 + scale_mlp) + shift_mlp
    h1 = jnp.dot(z2.astype(bf16), w1_ref[...],
                 preferred_element_type=f32) + b1_ref[...]
    h1 = _gelu_tanh(h1)
    h2 = jnp.dot(h1.astype(bf16), w2_ref[...],
                 preferred_element_type=f32) + b2_ref[...]
    x = x + gate_mlp * h2

    o_ref[0] = x.astype(o_ref.dtype)


def prepare_params(p, num_heads=NUM_HEADS):
    """One-time weight layout prep (hoisted out of the per-call wrapper):
    head-major q/k/v slabs, softmax scale folded into q, adaLN weight split
    into six (H, H) chunks, matmul weights pre-cast to bf16, biases kept f32."""
    H = HIDDEN
    D = H // num_heads
    scale = 1.0 / math.sqrt(D)
    bf16 = jnp.bfloat16

    w_qkv = p['w_qkv'].reshape(H, 3, num_heads, D)   # [h, t, n, d]
    b_qkv = p['b_qkv'].reshape(3, num_heads, 1, D)   # [t, n, 1, d]

    def head_major(w):                                # (H, N, D) -> (N, H, D)
        return jnp.transpose(w, (1, 0, 2))

    return {
        'w_ada': p['w_ada'].reshape(H, 6, H).transpose(1, 0, 2).astype(bf16),
        'b_ada': p['b_ada'].reshape(6, H),
        'w_q': (head_major(w_qkv[:, 0]) * scale).astype(bf16),
        'w_k': head_major(w_qkv[:, 1]).astype(bf16),
        'w_v': head_major(w_qkv[:, 2]).astype(bf16),
        'b_q': b_qkv[0] * scale,
        'b_k': b_qkv[1],
        'b_v': b_qkv[2],
        'w_out': p['w_out'].astype(bf16),
        'b_out': p['b_out'].reshape(1, H),
        'w1': p['w1'].astype(bf16),
        'b1': p['b1'].reshape(1, MLP_HIDDEN),
        'w2': p['w2'].astype(bf16),
        'b2': p['b2'].reshape(1, H),
    }


def _resident(arr):
    """Full-array block with a constant index_map: stays VMEM-resident across
    the (parallel) batch grid -- no per-step re-fetch."""
    shape = tuple(arr.shape)
    zero = (0,) * len(shape)
    return pl.BlockSpec(shape, lambda b, _z=zero: _z)


def dit_block(x, c, pp, num_heads=NUM_HEADS):
    """x: (A, B, H) in the PyTorch (seq-first) layout, c: (A, H).
    pp: output of prepare_params()."""
    A, B, H = x.shape

    # Batch-major view for the per-b grid.  At production sizes keep the
    # activations batch-major between blocks so this transpose disappears.
    x_bah = jnp.transpose(x, (1, 0, 2))                            # (B, A, H)

    weights = (pp['w_ada'], pp['b_ada'],
               pp['w_q'], pp['b_q'], pp['w_k'], pp['b_k'], pp['w_v'], pp['b_v'],
               pp['w_out'], pp['b_out'], pp['w1'], pp['b1'], pp['w2'], pp['b2'])

    in_specs = ([pl.BlockSpec((1, A, H), lambda b: (b, 0, 0)),     # x: per-b slab
                 pl.BlockSpec((A, H), lambda b: (0, 0))]           # c: constant in b
                + [_resident(w) for w in weights])

    out_bah = pl.pallas_call(
        functools.partial(dit_block_kernel, num_heads=num_heads),
        out_shape=jax.ShapeDtypeStruct((B, A, H), x.dtype),
        grid_spec=pltpu.PrefetchScalarGridSpec(
            num_scalar_prefetch=0,
            grid=(B,),
            in_specs=in_specs,
            out_specs=pl.BlockSpec((1, A, H), lambda b: (b, 0, 0)),
        ),
        compiler_params=pltpu.CompilerParams(
            # B (independent columns) shards across TensorCores (v7x megacore).
            dimension_semantics=("parallel",),
            # Toy shapes need ~KBs; production budgets must be re-derived per
            # generation (v7x has only 64 MiB VMEM -> tile the 6H/4H weight
            # axes or split MSA/MLP into two calls there).
            vmem_limit_bytes=32 * 1024 * 1024,
        ),
    )(x_bah, c, *weights)
    return jnp.transpose(out_bah, (1, 0, 2))                       # back to (A, B, H)


def dit_block_ref(x, c, p):
    """Pure-JAX f32 reference, replicating the PyTorch module exactly."""
    A, B, H = x.shape

    def modulate(v, shift, scale):
        return v * (1 + scale[:, None, :]) + shift[:, None, :]

    mod = (c * jax.nn.sigmoid(c)) @ p['w_ada'] + p['b_ada']
    (shift_msa, scale_msa, gate_msa,
     shift_mlp, scale_mlp, gate_mlp) = jnp.split(mod, 6, axis=1)

    z = modulate(_layernorm(x), shift_msa, scale_msa)              # (A, B, H)
    qkv = z @ p['w_qkv'] + p['b_qkv']
    q, k, v = jnp.split(qkv, 3, axis=-1)
    qh = q.reshape(A, B, NUM_HEADS, HEAD_DIM)
    kh = k.reshape(A, B, NUM_HEADS, HEAD_DIM)
    vh = v.reshape(A, B, NUM_HEADS, HEAD_DIM)
    s = jnp.einsum('abnd,cbnd->bnac', qh, kh) / math.sqrt(HEAD_DIM)
    pattn = jax.nn.softmax(s, axis=-1)
    o = jnp.einsum('bnac,cbnd->abnd', pattn, vh).reshape(A, B, H)
    attn_out = o @ p['w_out'] + p['b_out']
    x = x + gate_msa[:, None, :] * attn_out

    z = modulate(_layernorm(x), shift_mlp, scale_mlp)
    h1 = _gelu_tanh(z @ p['w1'] + p['b1'])
    x = x + gate_mlp[:, None, :] * (h1 @ p['w2'] + p['b2'])
    return x


def init_params(key):
    ks = jax.random.split(key, 12)
    n = lambda k, s: (0.02 * jax.random.normal(k, s)).astype(jnp.float32)
    return {
        'w_ada': n(ks[0], (HIDDEN, 6 * HIDDEN)),
        'b_ada': n(ks[1], (6 * HIDDEN,)),
        'w_qkv': n(ks[2], (HIDDEN, 3 * HIDDEN)),
        'b_qkv': n(ks[3], (3 * HIDDEN,)),
        'w_out': n(ks[4], (HIDDEN, HIDDEN)),
        'b_out': n(ks[5], (HIDDEN,)),
        'w1': n(ks[6], (HIDDEN, MLP_HIDDEN)),
        'b1': n(ks[7], (MLP_HIDDEN,)),
        'w2': n(ks[8], (MLP_HIDDEN, HIDDEN)),
        'b2': n(ks[9], (HIDDEN,)),
    }


if __name__ == "__main__":
    key = jax.random.PRNGKey(0)
    kx, kc, kp = jax.random.split(key, 3)

    A, B = 8, 2   # A = seq / modulation axis (dim 0), B = attention batch (dim 1)
    x = jax.random.normal(kx, (A, B, HIDDEN), jnp.float32)
    c = jax.random.normal(kc, (A, HIDDEN), jnp.float32)
    params = init_params(kp)
    prepared = prepare_params(params)      # one-time weight layout prep

    out = jax.block_until_ready(dit_block(x, c, prepared))

    ref = dit_block_ref(x, c, params)
    assert out.shape == (A, B, HIDDEN)
    # bf16-staged matmul operands (f32 accumulation) vs a pure-f32 reference.
    assert jnp.allclose(out, ref, atol=5e-3, rtol=5e-3), \
        "Pallas kernel mismatch vs reference"

    print("KERNEL_OK")
</pallas_src>

<mosaic_0001>
module attributes {stable_mosaic.version = 11 : i64} {
  func.func @dit_block_kernel(%arg0: i32, %arg1: memref<1x8x32xf32, #tpu.memory_space<vmem>>, %arg2: memref<8x32xf32, #tpu.memory_space<vmem>>, %arg3: memref<6x32x32xbf16, #tpu.memory_space<vmem>>, %arg4: memref<6x32xf32, #tpu.memory_space<vmem>>, %arg5: memref<4x32x8xbf16, #tpu.memory_space<vmem>>, %arg6: memref<4x1x8xf32, #tpu.memory_space<vmem>>, %arg7: memref<4x32x8xbf16, #tpu.memory_space<vmem>>, %arg8: memref<4x1x8xf32, #tpu.memory_space<vmem>>, %arg9: memref<4x32x8xbf16, #tpu.memory_space<vmem>>, %arg10: memref<4x1x8xf32, #tpu.memory_space<vmem>>, %arg11: memref<32x32xbf16, #tpu.memory_space<vmem>>, %arg12: memref<1x32xf32, #tpu.memory_space<vmem>>, %arg13: memref<32x128xbf16, #tpu.memory_space<vmem>>, %arg14: memref<1x128xf32, #tpu.memory_space<vmem>>, %arg15: memref<128x32xbf16, #tpu.memory_space<vmem>>, %arg16: memref<1x32xf32, #tpu.memory_space<vmem>>, %arg17: memref<1x8x32xf32, #tpu.memory_space<vmem>>) attributes {dimension_semantics = [#tpu.dimension_semantics<parallel>], iteration_bounds = array<i64: 2>, scalar_prefetch = 0 : i64, scratch_operands = 0 : i64, tpu.core_type = #tpu.core_type<tc>, window_params = [{transform_indices = @transform_0, window_bounds = array<i64: 1, 8, 32>}, {pipeline_mode = #tpu.pipeline_mode<synchronous>, transform_indices = @transform_1, window_bounds = array<i64: 8, 32>}, {pipeline_mode = #tpu.pipeline_mode<synchronous>, transform_indices = @transform_2, window_bounds = array<i64: 6, 32, 32>}, {pipeline_mode = #tpu.pipeline_mode<synchronous>, transform_indices = @transform_3, window_bounds = array<i64: 6, 32>}, {pipeline_mode = #tpu.pipeline_mode<synchronous>, transform_indices = @transform_4, window_bounds = array<i64: 4, 32, 8>}, {pipeline_mode = #tpu.pipeline_mode<synchronous>, transform_indices = @transform_5, window_bounds = array<i64: 4, 1, 8>}, {pipeline_mode = #tpu.pipeline_mode<synchronous>, transform_indices = @transform_6, window_bounds = array<i64: 4, 32, 8>}, {pipeline_mode = #tpu.pipeline_mode<synchronous>, transform_indices = @transform_7, window_bounds = array<i64: 4, 1, 8>}, {pipeline_mode = #tpu.pipeline_mode<synchronous>, transform_indices = @transform_8, window_bounds = array<i64: 4, 32, 8>}, {pipeline_mode = #tpu.pipeline_mode<synchronous>, transform_indices = @transform_9, window_bounds = array<i64: 4, 1, 8>}, {pipeline_mode = #tpu.pipeline_mode<synchronous>, transform_indices = @transform_10, window_bounds = array<i64: 32, 32>}, {pipeline_mode = #tpu.pipeline_mode<synchronous>, transform_indices = @transform_11, window_bounds = array<i64: 1, 32>}, {pipeline_mode = #tpu.pipeline_mode<synchronous>, transform_indices = @transform_12, window_bounds = array<i64: 32, 128>}, {pipeline_mode = #tpu.pipeline_mode<synchronous>, transform_indices = @transform_13, window_bounds = array<i64: 1, 128>}, {pipeline_mode = #tpu.pipeline_mode<synchronous>, transform_indices = @transform_14, window_bounds = array<i64: 128, 32>}, {pipeline_mode = #tpu.pipeline_mode<synchronous>, transform_indices = @transform_15, window_bounds = array<i64: 1, 32>}, {transform_indices = @transform_16, window_bounds = array<i64: 1, 8, 32>}]} {
    %c0 = arith.constant 0 : index
    %c0_0 = arith.constant 0 : index
    %c0_1 = arith.constant 0 : index
    %0 = vector.load %arg1[%c0, %c0_0, %c0_1] : memref<1x8x32xf32, #tpu.memory_space<vmem>>, vector<1x8x32xf32>
    %1 = vector.shape_cast %0 : vector<1x8x32xf32> to vector<8x32xf32>
    %c0_2 = arith.constant 0 : index
    %c0_3 = arith.constant 0 : index
    %2 = vector.load %arg2[%c0_2, %c0_3] : memref<8x32xf32, #tpu.memory_space<vmem>>, vector<8x32xf32>
    %3 = arith.negf %2 : vector<8x32xf32>
    %4 = math.exp %3 : vector<8x32xf32>
    %cst = arith.constant 1.000000e+00 : f32
    %5 = vector.broadcast %cst : f32 to vector<8x32xf32>
    %6 = arith.addf %5, %4 : vector<8x32xf32>
    %7 = arith.divf %5, %6 : vector<8x32xf32>
    %8 = arith.mulf %2, %7 : vector<8x32xf32>
    %9 = arith.truncf %8 : vector<8x32xf32> to vector<8x32xbf16>
    %c0_4 = arith.constant 0 : index
    %c0_5 = arith.constant 0 : index
    %c0_6 = arith.constant 0 : index
    %10 = vector.load %arg3[%c0_4, %c0_5, %c0_6] : memref<6x32x32xbf16, #tpu.memory_space<vmem>>, vector<1x32x32xbf16>
    %11 = vector.shape_cast %10 : vector<1x32x32xbf16> to vector<32x32xbf16>
    %cst_7 = arith.constant dense<0.000000e+00> : vector<8x32xf32>
    %12 = tpu.matmul %9, %11, %cst_7 {dimension_numbers = #tpu.dot_dimension_numbers<[1], [0], [0], [1], [0, 0, 1, 1], [], []>} : vector<8x32xbf16>, vector<32x32xbf16>, vector<8x32xf32> -> vector<8x32xf32>
    %c0_8 = arith.constant 0 : index
    %c0_9 = arith.constant 0 : index
    %13 = vector.load %arg4[%c0_8, %c0_9] : memref<6x32xf32, #tpu.memory_space<vmem>>, vector<1x32xf32>
    %14 = vector.shape_cast %13 : vector<1x32xf32> to vector<32xf32>
    %15 = vector.shape_cast %14 : vector<32xf32> to vector<1x32xf32>
    %16 = vector.broadcast %15 : vector<1x32xf32> to vector<8x32xf32>
    %17 = arith.addf %12, %16 : vector<8x32xf32>
    %c1 = arith.constant 1 : index
    %c0_10 = arith.constant 0 : index
    %c0_11 = arith.constant 0 : index
    %18 = vector.load %arg3[%c1, %c0_10, %c0_11] : memref<6x32x32xbf16, #tpu.memory_space<vmem>>, vector<1x32x32xbf16>
    %19 = vector.shape_cast %18 : vector<1x32x32xbf16> to vector<32x32xbf16>
    %cst_12 = arith.constant dense<0.000000e+00> : vector<8x32xf32>
    %20 = tpu.matmul %9, %19, %cst_12 {dimension_numbers = #tpu.dot_dimension_numbers<[1], [0], [0], [1], [0, 0, 1, 1], [], []>} : vector<8x32xbf16>, vector<32x32xbf16>, vector<8x32xf32> -> vector<8x32xf32>
    %c1_13 = arith.constant 1 : index
    %c0_14 = arith.constant 0 : index
    %21 = vector.load %arg4[%c1_13, %c0_14] : memref<6x32xf32, #tpu.memory_space<vmem>>, vector<1x32xf32>
    %22 = vector.shape_cast %21 : vector<1x32xf32> to vector<32xf32>
    %23 = vector.shape_cast %22 : vector<32xf32> to vector<1x32xf32>
    %24 = vector.broadcast %23 : vector<1x32xf32> to vector<8x32xf32>
    %25 = arith.addf %20, %24 : vector<8x32xf32>
    %c2 = arith.constant 2 : index
    %c0_15 = arith.constant 0 : index
    %c0_16 = arith.constant 0 : index
    %26 = vector.load %arg3[%c2, %c0_15, %c0_16] : memref<6x32x32xbf16, #tpu.memory_space<vmem>>, vector<1x32x32xbf16>
    %27 = vector.shape_cast %26 : vector<1x32x32xbf16> to vector<32x32xbf16>
    %cst_17 = arith.constant dense<0.000000e+00> : vector<8x32xf32>
    %28 = tpu.matmul %9, %27, %cst_17 {dimension_numbers = #tpu.dot_dimension_numbers<[1], [0], [0], [1], [0, 0, 1, 1], [], []>} : vector<8x32xbf16>, vector<32x32xbf16>, vector<8x32xf32> -> vector<8x32xf32>
    %c2_18 = arith.constant 2 : index
    %c0_19 = arith.constant 0 : index
    %29 = vector.load %arg4[%c2_18, %c0_19] : memref<6x32xf32, #tpu.memory_space<vmem>>, vector<1x32xf32>
    %30 = vector.shape_cast %29 : vector<1x32xf32> to vector<32xf32>
    %31 = vector.shape_cast %30 : vector<32xf32> to vector<1x32xf32>
    %32 = vector.broadcast %31 : vector<1x32xf32> to vector<8x32xf32>
    %33 = arith.addf %28, %32 : vector<8x32xf32>
    %c3 = arith.constant 3 : index
    %c0_20 = arith.constant 0 : index
    %c0_21 = arith.constant 0 : index
    %34 = vector.load %arg3[%c3, %c0_20, %c0_21] : memref<6x32x32xbf16, #tpu.memory_space<vmem>>, vector<1x32x32xbf16>
    %35 = vector.shape_cast %34 : vector<1x32x32xbf16> to vector<32x32xbf16>
    %cst_22 = arith.constant dense<0.000000e+00> : vector<8x32xf32>
    %36 = tpu.matmul %9, %35, %cst_22 {dimension_numbers = #tpu.dot_dimension_numbers<[1], [0], [0], [1], [0, 0, 1, 1], [], []>} : vector<8x32xbf16>, vector<32x32xbf16>, vector<8x32xf32> -> vector<8x32xf32>
    %c3_23 = arith.constant 3 : index
    %c0_24 = arith.constant 0 : index
    %37 = vector.load %arg4[%c3_23, %c0_24] : memref<6x32xf32, #tpu.memory_space<vmem>>, vector<1x32xf32>
    %38 = vector.shape_cast %37 : vector<1x32xf32> to vector<32xf32>
    %39 = vector.shape_cast %38 : vector<32xf32> to vector<1x32xf32>
    %40 = vector.broadcast %39 : vector<1x32xf32> to vector<8x32xf32>
    %41 = arith.addf %36, %40 : vector<8x32xf32>
    %c4 = arith.constant 4 : index
    %c0_25 = arith.constant 0 : index
    %c0_26 = arith.constant 0 : index
    %42 = vector.load %arg3[%c4, %c0_25, %c0_26] : memref<6x32x32xbf16, #tpu.memory_space<vmem>>, vector<1x32x32xbf16>
    %43 = vector.shape_cast %42 : vector<1x32x32xbf16> to vector<32x32xbf16>
    %cst_27 = arith.constant dense<0.000000e+00> : vector<8x32xf32>
    %44 = tpu.matmul %9, %43, %cst_27 {dimension_numbers = #tpu.dot_dimension_numbers<[1], [0], [0], [1], [0, 0, 1, 1], [], []>} : vector<8x32xbf16>, vector<32x32xbf16>, vector<8x32xf32> -> vector<8x32xf32>
    %c4_28 = arith.constant 4 : index
    %c0_29 = arith.constant 0 : index
    %45 = vector.load %arg4[%c4_28, %c0_29] : memref<6x32xf32, #tpu.memory_space<vmem>>, vector<1x32xf32>
    %46 = vector.shape_cast %45 : vector<1x32xf32> to vector<32xf32>
    %47 = vector.shape_cast %46 : vector<32xf32> to vector<1x32xf32>
    %48 = vector.broadcast %47 : vector<1x32xf32> to vector<8x32xf32>
    %49 = arith.addf %44, %48 : vector<8x32xf32>
    %c5 = arith.constant 5 : index
    %c0_30 = arith.constant 0 : index
    %c0_31 = arith.constant 0 : index
    %50 = vector.load %arg3[%c5, %c0_30, %c0_31] : memref<6x32x32xbf16, #tpu.memory_space<vmem>>, vector<1x32x32xbf16>
    %51 = vector.shape_cast %50 : vector<1x32x32xbf16> to vector<32x32xbf16>
    %cst_32 = arith.constant dense<0.000000e+00> : vector<8x32xf32>
    %52 = tpu.matmul %9, %51, %cst_32 {dimension_numbers = #tpu.dot_dimension_numbers<[1], [0], [0], [1], [0, 0, 1, 1], [], []>} : vector<8x32xbf16>, vector<32x32xbf16>, vector<8x32xf32> -> vector<8x32xf32>
    %c5_33 = arith.constant 5 : index
    %c0_34 = arith.constant 0 : index
    %53 = vector.load %arg4[%c5_33, %c0_34] : memref<6x32xf32, #tpu.memory_space<vmem>>, vector<1x32xf32>
    %54 = vector.shape_cast %53 : vector<1x32xf32> to vector<32xf32>
    %55 = vector.shape_cast %54 : vector<32xf32> to vector<1x32xf32>
    %56 = vector.broadcast %55 : vector<1x32xf32> to vector<8x32xf32>
    %57 = arith.addf %52, %56 : vector<8x32xf32>
    %cst_35 = arith.constant dense<0.000000e+00> : vector<8xf32>
    %58 = vector.multi_reduction <add>, %1, %cst_35 [1] : vector<8x32xf32> to vector<8xf32>
    %59 = vector.shape_cast %58 : vector<8xf32> to vector<8x1xf32>
    %cst_36 = arith.constant 3.200000e+01 : f32
    %60 = vector.broadcast %cst_36 : f32 to vector<8x1xf32>
    %61 = arith.divf %59, %60 : vector<8x1xf32>
    %62 = vector.broadcast %61 : vector<8x1xf32> to vector<8x32xf32>
    %63 = arith.subf %1, %62 : vector<8x32xf32>
    %64 = arith.mulf %63, %63 : vector<8x32xf32>
    %cst_37 = arith.constant dense<0.000000e+00> : vector<8xf32>
    %65 = vector.multi_reduction <add>, %64, %cst_37 [1] : vector<8x32xf32> to vector<8xf32>
    %66 = vector.shape_cast %65 : vector<8xf32> to vector<8x1xf32>
    %cst_38 = arith.constant 3.200000e+01 : f32
    %67 = vector.broadcast %cst_38 : f32 to vector<8x1xf32>
    %68 = arith.divf %66, %67 : vector<8x1xf32>
    %69 = vector.broadcast %61 : vector<8x1xf32> to vector<8x32xf32>
    %70 = arith.subf %1, %69 : vector<8x32xf32>
    %cst_39 = arith.constant 9.99999997E-7 : f32
    %71 = vector.broadcast %cst_39 : f32 to vector<8x1xf32>
    %72 = arith.addf %68, %71 : vector<8x1xf32>
    %73 = math.rsqrt %72 : vector<8x1xf32>
    %74 = vector.broadcast %73 : vector<8x1xf32> to vector<8x32xf32>
    %75 = arith.mulf %70, %74 : vector<8x32xf32>
    %cst_40 = arith.constant 1.000000e+00 : f32
    %76 = vector.broadcast %cst_40 : f32 to vector<8x32xf32>
    %77 = arith.addf %76, %25 : vector<8x32xf32>
    %78 = arith.mulf %75, %77 : vector<8x32xf32>
    %79 = arith.addf %78, %17 : vector<8x32xf32>
    %80 = arith.truncf %79 : vector<8x32xf32> to vector<8x32xbf16>
    %81 = vector.shape_cast %80 : vector<8x32xbf16> to vector<1x8x32xbf16>
    %82 = vector.broadcast %81 : vector<1x8x32xbf16> to vector<4x8x32xbf16>
    %c0_41 = arith.constant 0 : index
    %c0_42 = arith.constant 0 : index
    %c0_43 = arith.constant 0 : index
    %83 = vector.load %arg5[%c0_41, %c0_42, %c0_43] : memref<4x32x8xbf16, #tpu.memory_space<vmem>>, vector<4x32x8xbf16>
    "tpu.trace_start"() <{level = 10 : i32, message = "nah,nhd->nad"}> : () -> ()
    %cst_44 = arith.constant dense<0.000000e+00> : vector<4x8x8xf32>
    %84 = tpu.matmul %82, %83, %cst_44 {dimension_numbers = #tpu.dot_dimension_numbers<[2], [1], [1], [2], [0, 0, 0, 1, 1, 2], [0], [0]>} : vector<4x8x32xbf16>, vector<4x32x8xbf16>, vector<4x8x8xf32> -> vector<4x8x8xf32>
    "tpu.trace_stop"() : () -> ()
    %c0_45 = arith.constant 0 : index
    %c0_46 = arith.constant 0 : index
    %c0_47 = arith.constant 0 : index
    %85 = vector.load %arg6[%c0_45, %c0_46, %c0_47] : memref<4x1x8xf32, #tpu.memory_space<vmem>>, vector<4x1x8xf32>
    %86 = vector.broadcast %85 : vector<4x1x8xf32> to vector<4x8x8xf32>
    %87 = arith.addf %84, %86 : vector<4x8x8xf32>
    %c0_48 = arith.constant 0 : index
    %c0_49 = arith.constant 0 : index
    %c0_50 = arith.constant 0 : index
    %88 = vector.load %arg7[%c0_48, %c0_49, %c0_50] : memref<4x32x8xbf16, #tpu.memory_space<vmem>>, vector<4x32x8xbf16>
    "tpu.trace_start"() <{level = 10 : i32, message = "nah,nhd->nad"}> : () -> ()
    %cst_51 = arith.constant dense<0.000000e+00> : vector<4x8x8xf32>
    %89 = tpu.matmul %82, %88, %cst_51 {dimension_numbers = #tpu.dot_dimension_numbers<[2], [1], [1], [2], [0, 0, 0, 1, 1, 2], [0], [0]>} : vector<4x8x32xbf16>, vector<4x32x8xbf16>, vector<4x8x8xf32> -> vector<4x8x8xf32>
    "tpu.trace_stop"() : () -> ()
    %c0_52 = arith.constant 0 : index
    %c0_53 = arith.constant 0 : index
    %c0_54 = arith.constant 0 : index
    %90 = vector.load %arg8[%c0_52, %c0_53, %c0_54] : memref<4x1x8xf32, #tpu.memory_space<vmem>>, vector<4x1x8xf32>
    %91 = vector.broadcast %90 : vector<4x1x8xf32> to vector<4x8x8xf32>
    %92 = arith.addf %89, %91 : vector<4x8x8xf32>
    %c0_55 = arith.constant 0 : index
    %c0_56 = arith.constant 0 : index
    %c0_57 = arith.constant 0 : index
    %93 = vector.load %arg9[%c0_55, %c0_56, %c0_57] : memref<4x32x8xbf16, #tpu.memory_space<vmem>>, vector<4x32x8xbf16>
    "tpu.trace_start"() <{level = 10 : i32, message = "nah,nhd->nad"}> : () -> ()
    %cst_58 = arith.constant dense<0.000000e+00> : vector<4x8x8xf32>
    %94 = tpu.matmul %82, %93, %cst_58 {dimension_numbers = #tpu.dot_dimension_numbers<[2], [1], [1], [2], [0, 0, 0, 1, 1, 2], [0], [0]>} : vector<4x8x32xbf16>, vector<4x32x8xbf16>, vector<4x8x8xf32> -> vector<4x8x8xf32>
    "tpu.trace_stop"() : () -> ()
    %c0_59 = arith.constant 0 : index
    %c0_60 = arith.constant 0 : index
    %c0_61 = arith.constant 0 : index
    %95 = vector.load %arg10[%c0_59, %c0_60, %c0_61] : memref<4x1x8xf32, #tpu.memory_space<vmem>>, vector<4x1x8xf32>
    %96 = vector.broadcast %95 : vector<4x1x8xf32> to vector<4x8x8xf32>
    %97 = arith.addf %94, %96 : vector<4x8x8xf32>
    %98 = arith.truncf %87 : vector<4x8x8xf32> to vector<4x8x8xbf16>
    %99 = arith.truncf %92 : vector<4x8x8xf32> to vector<4x8x8xbf16>
    "tpu.trace_start"() <{level = 10 : i32, message = "nad,nkd->nak"}> : () -> ()
    %cst_62 = arith.constant dense<0.000000e+00> : vector<4x8x8xf32>
    %100 = tpu.matmul %98, %99, %cst_62 {dimension_numbers = #tpu.dot_dimension_numbers<[2], [2], [1], [1], [0, 0, 0, 1, 1, 1], [0], [0]>} : vector<4x8x8xbf16>, vector<4x8x8xbf16>, vector<4x8x8xf32> -> vector<4x8x8xf32>
    "tpu.trace_stop"() : () -> ()
    %cst_63 = arith.constant dense<0xFF800000> : vector<4x8xf32>
    %101 = vector.multi_reduction <maximumf>, %100, %cst_63 [2] : vector<4x8x8xf32> to vector<4x8xf32>
    %102 = vector.shape_cast %101 : vector<4x8xf32> to vector<4x8x1xf32>
    %103 = vector.broadcast %102 : vector<4x8x1xf32> to vector<4x8x8xf32>
    %104 = arith.subf %100, %103 : vector<4x8x8xf32>
    %105 = math.exp %104 : vector<4x8x8xf32>
    %cst_64 = arith.constant dense<0.000000e+00> : vector<4x8xf32>
    %106 = vector.multi_reduction <add>, %105, %cst_64 [2] : vector<4x8x8xf32> to vector<4x8xf32>
    %107 = vector.shape_cast %106 : vector<4x8xf32> to vector<4x8x1xf32>
    %108 = tpu.reciprocal %107 {approx = true} : vector<4x8x1xf32> -> vector<4x8x1xf32>
    %109 = vector.broadcast %108 : vector<4x8x1xf32> to vector<4x8x8xf32>
    %110 = arith.mulf %105, %109 : vector<4x8x8xf32>
    %111 = arith.truncf %110 : vector<4x8x8xf32> to vector<4x8x8xbf16>
    %112 = arith.truncf %97 : vector<4x8x8xf32> to vector<4x8x8xbf16>
    "tpu.trace_start"() <{level = 10 : i32, message = "nak,nkd->nad"}> : () -> ()
    %cst_65 = arith.constant dense<0.000000e+00> : vector<4x8x8xf32>
    %113 = tpu.matmul %111, %112, %cst_65 {dimension_numbers = #tpu.dot_dimension_numbers<[2], [1], [1], [2], [0, 0, 0, 1, 1, 2], [0], [0]>} : vector<4x8x8xbf16>, vector<4x8x8xbf16>, vector<4x8x8xf32> -> vector<4x8x8xf32>
    "tpu.trace_stop"() : () -> ()
    %114 = vector.extract_strided_slice %113 {offsets = [0, 0, 0], sizes = [1, 8, 8], strides = [1, 1, 1]} : vector<4x8x8xf32> to vector<1x8x8xf32>
    %115 = vector.shape_cast %114 : vector<1x8x8xf32> to vector<8x8xf32>
    %116 = vector.extract_strided_slice %113 {offsets = [1, 0, 0], sizes = [1, 8, 8], strides = [1, 1, 1]} : vector<4x8x8xf32> to vector<1x8x8xf32>
    %117 = vector.shape_cast %116 : vector<1x8x8xf32> to vector<8x8xf32>
    %118 = vector.extract_strided_slice %113 {offsets = [2, 0, 0], sizes = [1, 8, 8], strides = [1, 1, 1]} : vector<4x8x8xf32> to vector<1x8x8xf32>
    %119 = vector.shape_cast %118 : vector<1x8x8xf32> to vector<8x8xf32>
    %120 = vector.extract_strided_slice %113 {offsets = [3, 0, 0], sizes = [1, 8, 8], strides = [1, 1, 1]} : vector<4x8x8xf32> to vector<1x8x8xf32>
    %121 = vector.shape_cast %120 : vector<1x8x8xf32> to vector<8x8xf32>
    %122 = tpu.concatenate %115, %117, %119, %121 in 1 : vector<8x8xf32>, vector<8x8xf32>, vector<8x8xf32>, vector<8x8xf32> -> vector<8x32xf32>
    %123 = arith.truncf %122 : vector<8x32xf32> to vector<8x32xbf16>
    %c0_66 = arith.constant 0 : index
    %c0_67 = arith.constant 0 : index
    %124 = vector.load %arg11[%c0_66, %c0_67] : memref<32x32xbf16, #tpu.memory_space<vmem>>, vector<32x32xbf16>
    %cst_68 = arith.constant dense<0.000000e+00> : vector<8x32xf32>
    %125 = tpu.matmul %123, %124, %cst_68 {dimension_numbers = #tpu.dot_dimension_numbers<[1], [0], [0], [1], [0, 0, 1, 1], [], []>} : vector<8x32xbf16>, vector<32x32xbf16>, vector<8x32xf32> -> vector<8x32xf32>
    %c0_69 = arith.constant 0 : index
    %c0_70 = arith.constant 0 : index
    %126 = vector.load %arg12[%c0_69, %c0_70] : memref<1x32xf32, #tpu.memory_space<vmem>>, vector<1x32xf32>
    %127 = vector.broadcast %126 : vector<1x32xf32> to vector<8x32xf32>
    %128 = arith.addf %125, %127 : vector<8x32xf32>
    %129 = arith.mulf %33, %128 : vector<8x32xf32>
    %130 = arith.addf %1, %129 : vector<8x32xf32>
    %cst_71 = arith.constant dense<0.000000e+00> : vector<8xf32>
    %131 = vector.multi_reduction <add>, %130, %cst_71 [1] : vector<8x32xf32> to vector<8xf32>
    %132 = vector.shape_cast %131 : vector<8xf32> to vector<8x1xf32>
    %cst_72 = arith.constant 3.200000e+01 : f32
    %133 = vector.broadcast %cst_72 : f32 to vector<8x1xf32>
    %134 = arith.divf %132, %133 : vector<8x1xf32>
    %135 = vector.broadcast %134 : vector<8x1xf32> to vector<8x32xf32>
    %136 = arith.subf %130, %135 : vector<8x32xf32>
    %137 = arith.mulf %136, %136 : vector<8x32xf32>
    %cst_73 = arith.constant dense<0.000000e+00> : vector<8xf32>
    %138 = vector.multi_reduction <add>, %137, %cst_73 [1] : vector<8x32xf32> to vector<8xf32>
    %139 = vector.shape_cast %138 : vector<8xf32> to vector<8x1xf32>
    %cst_74 = arith.constant 3.200000e+01 : f32
    %140 = vector.broadcast %cst_74 : f32 to vector<8x1xf32>
    %141 = arith.divf %139, %140 : vector<8x1xf32>
    %142 = vector.broadcast %134 : vector<8x1xf32> to vector<8x32xf32>
    %143 = arith.subf %130, %142 : vector<8x32xf32>
    %cst_75 = arith.constant 9.99999997E-7 : f32
    %144 = vector.broadcast %cst_75 : f32 to vector<8x1xf32>
    %145 = arith.addf %141, %144 : vector<8x1xf32>
    %146 = math.rsqrt %145 : vector<8x1xf32>
    %147 = vector.broadcast %146 : vector<8x1xf32> to vector<8x32xf32>
    %148 = arith.mulf %143, %147 : vector<8x32xf32>
    %cst_76 = arith.constant 1.000000e+00 : f32
    %149 = vector.broadcast %cst_76 : f32 to vector<8x32xf32>
    %150 = arith.addf %149, %49 : vector<8x32xf32>
    %151 = arith.mulf %148, %150 : vector<8x32xf32>
    %152 = arith.addf %151, %41 : vector<8x32xf32>
    %153 = arith.truncf %152 : vector<8x32xf32> to vector<8x32xbf16>
    %c0_77 = arith.constant 0 : index
    %c0_78 = arith.constant 0 : index
    %154 = vector.load %arg13[%c0_77, %c0_78] : memref<32x128xbf16, #tpu.memory_space<vmem>>, vector<32x128xbf16>
    %cst_79 = arith.constant dense<0.000000e+00> : vector<8x128xf32>
    %155 = tpu.matmul %153, %154, %cst_79 {dimension_numbers = #tpu.dot_dimension_numbers<[1], [0], [0], [1], [0, 0, 1, 1], [], []>} : vector<8x32xbf16>, vector<32x128xbf16>, vector<8x128xf32> -> vector<8x128xf32>
    %c0_80 = arith.constant 0 : index
    %c0_81 = arith.constant 0 : index
    %156 = vector.load %arg14[%c0_80, %c0_81] : memref<1x128xf32, #tpu.memory_space<vmem>>, vector<1x128xf32>
    %157 = vector.broadcast %156 : vector<1x128xf32> to vector<8x128xf32>
    %158 = arith.addf %155, %157 : vector<8x128xf32>
    %cst_82 = arith.constant 5.000000e-01 : f32
    %159 = vector.broadcast %cst_82 : f32 to vector<8x128xf32>
    %160 = arith.mulf %159, %158 : vector<8x128xf32>
    %cst_83 = arith.constant 4.471500e-02 : f32
    %161 = vector.broadcast %cst_83 : f32 to vector<8x128xf32>
    %162 = arith.mulf %161, %158 : vector<8x128xf32>
    %163 = arith.mulf %162, %158 : vector<8x128xf32>
    %164 = arith.mulf %163, %158 : vector<8x128xf32>
    %165 = arith.addf %158, %164 : vector<8x128xf32>
    %cst_84 = arith.constant 0.797884583 : f32
    %166 = vector.broadcast %cst_84 : f32 to vector<8x128xf32>
    %167 = arith.mulf %166, %165 : vector<8x128xf32>
    %168 = math.tanh %167 : vector<8x128xf32>
    %cst_85 = arith.constant 1.000000e+00 : f32
    %169 = vector.broadcast %cst_85 : f32 to vector<8x128xf32>
    %170 = arith.addf %169, %168 : vector<8x128xf32>
    %171 = arith.mulf %160, %170 : vector<8x128xf32>
    %172 = arith.truncf %171 : vector<8x128xf32> to vector<8x128xbf16>
    %c0_86 = arith.constant 0 : index
    %c0_87 = arith.constant 0 : index
    %173 = vector.load %arg15[%c0_86, %c0_87] : memref<128x32xbf16, #tpu.memory_space<vmem>>, vector<128x32xbf16>
    %cst_88 = arith.constant dense<0.000000e+00> : vector<8x32xf32>
    %174 = tpu.matmul %172, %173, %cst_88 {dimension_numbers = #tpu.dot_dimension_numbers<[1], [0], [0], [1], [0, 0, 1, 1], [], []>} : vector<8x128xbf16>, vector<128x32xbf16>, vector<8x32xf32> -> vector<8x32xf32>
    %c0_89 = arith.constant 0 : index
    %c0_90 = arith.constant 0 : index
    %175 = vector.load %arg16[%c0_89, %c0_90] : memref<1x32xf32, #tpu.memory_space<vmem>>, vector<1x32xf32>
    %176 = vector.broadcast %175 : vector<1x32xf32> to vector<8x32xf32>
    %177 = arith.addf %174, %176 : vector<8x32xf32>
    %178 = arith.mulf %57, %177 : vector<8x32xf32>
    %179 = arith.addf %130, %178 : vector<8x32xf32>
    %c0_91 = arith.constant 0 : index
    %c0_92 = arith.constant 0 : index
    %c0_93 = arith.constant 0 : index
    %180 = vector.load %arg17[%c0_91, %c0_92, %c0_93] : memref<1x8x32xf32, #tpu.memory_space<vmem>>, vector<1x8x32xf32>
    %181 = vector.shape_cast %180 : vector<1x8x32xf32> to vector<8x32xf32>
    %182 = vector.shape_cast %179 : vector<8x32xf32> to vector<1x8x32xf32>
    tpu.vector_store %arg17[%c0_91, %c0_92, %c0_93], %182 {strides = array<i32>} : memref<1x8x32xf32, #tpu.memory_space<vmem>>, vector<1x8x32xf32>,
    return
  }
  func.func @transform_0(%arg0: i32) -> (i32, i32, i32) {
    %c0_i32 = arith.constant 0 : i32
    %c0_i32_0 = arith.constant 0 : i32
    %c0_i32_1 = arith.constant 0 : i32
    return %arg0, %c0_i32, %c0_i32_0 : i32, i32, i32
  }
  func.func @transform_1(%arg0: i32) -> (i32, i32) {
    %c0_i32 = arith.constant 0 : i32
    %c0_i32_0 = arith.constant 0 : i32
    %c0_i32_1 = arith.constant 0 : i32
    return %c0_i32, %c0_i32_0 : i32, i32
  }
  func.func @transform_2(%arg0: i32) -> (i32, i32, i32) {
    %c0_i32 = arith.constant 0 : i32
    %c0_i32_0 = arith.constant 0 : i32
    %c0_i32_1 = arith.constant 0 : i32
    %c0_i32_2 = arith.constant 0 : i32
    return %c0_i32, %c0_i32_0, %c0_i32_1 : i32, i32, i32
  }
  func.func @transform_3(%arg0: i32) -> (i32, i32) {
    %c0_i32 = arith.constant 0 : i32
    %c0_i32_0 = arith.constant 0 : i32
    %c0_i32_1 = arith.constant 0 : i32
    return %c0_i32, %c0_i32_0 : i32, i32
  }
  func.func @transform_4(%arg0: i32) -> (i32, i32, i32) {
    %c0_i32 = arith.constant 0 : i32
    %c0_i32_0 = arith.constant 0 : i32
    %c0_i32_1 = arith.constant 0 : i32
    %c0_i32_2 = arith.constant 0 : i32
    return %c0_i32, %c0_i32_0, %c0_i32_1 : i32, i32, i32
  }
  func.func @transform_5(%arg0: i32) -> (i32, i32, i32) {
    %c0_i32 = arith.constant 0 : i32
    %c0_i32_0 = arith.constant 0 : i32
    %c0_i32_1 = arith.constant 0 : i32
    %c0_i32_2 = arith.constant 0 : i32
    return %c0_i32, %c0_i32_0, %c0_i32_1 : i32, i32, i32
  }
  func.func @transform_6(%arg0: i32) -> (i32, i32, i32) {
    %c0_i32 = arith.constant 0 : i32
    %c0_i32_0 = arith.constant 0 : i32
    %c0_i32_1 = arith.constant 0 : i32
    %c0_i32_2 = arith.constant 0 : i32
    return %c0_i32, %c0_i32_0, %c0_i32_1 : i32, i32, i32
  }
  func.func @transform_7(%arg0: i32) -> (i32, i32, i32) {
    %c0_i32 = arith.constant 0 : i32
    %c0_i32_0 = arith.constant 0 : i32
    %c0_i32_1 = arith.constant 0 : i32
    %c0_i32_2 = arith.constant 0 : i32
    return %c0_i32, %c0_i32_0, %c0_i32_1 : i32, i32, i32
  }
  func.func @transform_8(%arg0: i32) -> (i32, i32, i32) {
    %c0_i32 = arith.constant 0 : i32
    %c0_i32_0 = arith.constant 0 : i32
    %c0_i32_1 = arith.constant 0 : i32
    %c0_i32_2 = arith.constant 0 : i32
    return %c0_i32, %c0_i32_0, %c0_i32_1 : i32, i32, i32
  }
  func.func @transform_9(%arg0: i32) -> (i32, i32, i32) {
    %c0_i32 = arith.constant 0 : i32
    %c0_i32_0 = arith.constant 0 : i32
    %c0_i32_1 = arith.constant 0 : i32
    %c0_i32_2 = arith.constant 0 : i32
    return %c0_i32, %c0_i32_0, %c0_i32_1 : i32, i32, i32
  }
  func.func @transform_10(%arg0: i32) -> (i32, i32) {
    %c0_i32 = arith.constant 0 : i32
    %c0_i32_0 = arith.constant 0 : i32
    %c0_i32_1 = arith.constant 0 : i32
    return %c0_i32, %c0_i32_0 : i32, i32
  }
  func.func @transform_11(%arg0: i32) -> (i32, i32) {
    %c0_i32 = arith.constant 0 : i32
    %c0_i32_0 = arith.constant 0 : i32
    %c0_i32_1 = arith.constant 0 : i32
    return %c0_i32, %c0_i32_0 : i32, i32
  }
  func.func @transform_12(%arg0: i32) -> (i32, i32) {
    %c0_i32 = arith.constant 0 : i32
    %c0_i32_0 = arith.constant 0 : i32
    %c0_i32_1 = arith.constant 0 : i32
    return %c0_i32, %c0_i32_0 : i32, i32
  }
  func.func @transform_13(%arg0: i32) -> (i32, i32) {
    %c0_i32 = arith.constant 0 : i32
    %c0_i32_0 = arith.constant 0 : i32
    %c0_i32_1 = arith.constant 0 : i32
    return %c0_i32, %c0_i32_0 : i32, i32
  }
  func.func @transform_14(%arg0: i32) -> (i32, i32) {
    %c0_i32 = arith.constant 0 : i32
    %c0_i32_0 = arith.constant 0 : i32
    %c0_i32_1 = arith.constant 0 : i32
    return %c0_i32, %c0_i32_0 : i32, i32
  }
  func.func @transform_15(%arg0: i32) -> (i32, i32) {
    %c0_i32 = arith.constant 0 : i32
    %c0_i32_0 = arith.constant 0 : i32
    %c0_i32_1 = arith.constant 0 : i32
    return %c0_i32, %c0_i32_0 : i32, i32
  }
  func.func @transform_16(%arg0: i32) -> (i32, i32, i32) {
    %c0_i32 = arith.constant 0 : i32
    %c0_i32_0 = arith.constant 0 : i32
    %c0_i32_1 = arith.constant 0 : i32
    return %arg0, %c0_i32, %c0_i32_0 : i32, i32, i32
  }
}

</mosaic_0001>

<llo_original>
// kernel: tpu_custom_call.1
$region0: #{tpu_custom_call.1}
  #allocation0 [shape = 'u32[]', space=smem, size = 0x4, offset = 0x4, fixed_abs, tag = 'smem constant byte address 0x4 - core index']
  #allocation1 [shape = 'u32[144,128]{1,0:T(1,128)}', space=vmem, size = 0x12000, scoped, tag = 'internal scratch']
  %s0 = inlined_call_operand.vmem [shape: f32[2,8,32], index: 0, kind: input, shape index: {}]
  %s1 = inlined_call_operand.vmem [shape: f32[8,32], index: 1, kind: input, shape index: {}]
  %s2 = inlined_call_operand.vmem [shape: bf16[6,32,32], index: 2, kind: input, shape index: {}]
  %s3 = inlined_call_operand.vmem [shape: f32[6,32], index: 3, kind: input, shape index: {}]
  %s4 = inlined_call_operand.vmem [shape: bf16[4,32,8], index: 4, kind: input, shape index: {}]
  %s5 = inlined_call_operand.vmem [shape: f32[4,1,8], index: 5, kind: input, shape index: {}]
  %s6 = inlined_call_operand.vmem [shape: bf16[4,32,8], index: 6, kind: input, shape index: {}]
  %s7 = inlined_call_operand.vmem [shape: f32[4,1,8], index: 7, kind: input, shape index: {}]
  %s8 = inlined_call_operand.vmem [shape: bf16[4,32,8], index: 8, kind: input, shape index: {}]
  %s9 = inlined_call_operand.vmem [shape: f32[4,1,8], index: 9, kind: input, shape index: {}]
  %s10 = inlined_call_operand.vmem [shape: bf16[32,32], index: 10, kind: input, shape index: {}]
  %s11 = inlined_call_operand.vmem [shape: f32[1,32], index: 11, kind: input, shape index: {}]
  %s12 = inlined_call_operand.vmem [shape: bf16[32,128], index: 12, kind: input, shape index: {}]
  %s13 = inlined_call_operand.vmem [shape: f32[1,128], index: 13, kind: input, shape index: {}]
  %s14 = inlined_call_operand.vmem [shape: bf16[128,32], index: 14, kind: input, shape index: {}]
  %s15 = inlined_call_operand.vmem [shape: f32[1,32], index: 15, kind: input, shape index: {}]
  %s16 = inlined_call_operand.hbm [shape: f32[2,8,32], index: 16, kind: output, shape index: {}]
  %s17 = sld [smem:[#allocation0]]
  $region97: #{tpu_custom_call.1} parent=0
    _
  %s19 = ssub.s32 1, %s17
  %s20 = scalar_select 0, %s19, %s17
  $region1: #{tpu_custom_call.1} parent=0
    #allocation2 [shape = 'u8[8192]{0}', space=vmem, size = 0x2000, scoped, tag = 'output window, operand 0']
    #allocation3 [shape = 's32[2]{0}', space=sflag, size = 0x8, scoped, tag = 'scoped memory for tpu_custom_call.1']
    %21 = vsyncpa [#allocation3], 0
    %s22 = scalar_lea.sflag [#allocation3], 1
    %23 = vsyncpa %s22, 0
    loop: start=0, step=1, limit=4
    $region2: #{tpu_custom_call.1} parent=1 // loop_pre_header
      _
    $region3: #{tpu_custom_call.1} parent=1 // loop_header
      %s25 = sphi 0, %s29
      %p26 = scmp.ge.s32.totalorder %s25, 4
      %s35 = sphi 0, %s37
      %s38 = sphi 0, %s35
      %s39 = sphi 0, %s38
      %s55 = sphi 0, %s39
      %s59 = sphi 0, %s59
      %s61 = sphi 0, %s59
      %s62 = sphi 0, %s61
      %s76 = sphi 0, %s62
      %s80 = sphi 0, %s80
      %s82 = sphi 0, %s80
      %s83 = sphi 0, %s82
      %s97 = sphi 0, %s83
      %s101 = sphi 0, %s101
      %s103 = sphi 0, %s101
      %s104 = sphi 0, %s103
      %s118 = sphi 0, %s104
      %s122 = sphi 0, %s122
      %s124 = sphi 0, %s122
      %s125 = sphi 0, %s124
      %s139 = sphi 0, %s125
      %s143 = sphi 0, %s143
      %s145 = sphi 0, %s143
      %s146 = sphi 0, %s145
      %s160 = sphi 0, %s146
      %s164 = sphi 0, %s164
      %s166 = sphi 0, %s164
      %s167 = sphi 0, %s166
      %s181 = sphi 0, %s167
      %s185 = sphi 0, %s185
      %s187 = sphi 0, %s185
      %s188 = sphi 0, %s187
      %s202 = sphi 0, %s188
      %s206 = sphi 0, %s206
      %s208 = sphi 0, %s206
      %s209 = sphi 0, %s208
      %s223 = sphi 0, %s209
      %s227 = sphi 0, %s227
      %s229 = sphi 0, %s227
      %s230 = sphi 0, %s229
      %s244 = sphi 0, %s230
      %s248 = sphi 0, %s248
      %s250 = sphi 0, %s248
      %s251 = sphi 0, %s250
      %s265 = sphi 0, %s251
      %s269 = sphi 0, %s269
      %s271 = sphi 0, %s269
      %s272 = sphi 0, %s271
      %s286 = sphi 0, %s272
      %s290 = sphi 0, %s290
      %s292 = sphi 0, %s290
      %s293 = sphi 0, %s292
      %s307 = sphi 0, %s293
      %s311 = sphi 0, %s311
      %s313 = sphi 0, %s311
      %s314 = sphi 0, %s313
      %s328 = sphi 0, %s314
      %s332 = sphi 0, %s332
      %s334 = sphi 0, %s332
      %s335 = sphi 0, %s334
      %s349 = sphi 0, %s335
      %s353 = sphi 0, %s353
      %s355 = sphi 0, %s353
      %s356 = sphi 0, %s355
      %s370 = sphi 0, %s356
      %s376 = sphi 0, %s378
      %s379 = sphi 0, %s376
      %s380 = sphi 0, %s379
      %s396 = sphi 0, %s380
    $region4: #{tpu_custom_call.1} parent=1 // loop_header_branch
      %28 = sbr.rel (%p26) target = $region8
    $region5: #{tpu_custom_call.1} parent=1 // loop_body
      %s30 = ssub.s32 %s25, 1
      %s31 = ssub.s32 %s25, 2
      %s32 = sadd.s32 %s25, 1
      %s33 = ssub.s32 %s25, %s32
      %p34 = scmp.eq.s32.totalorder %s33, 0
      %s36 = sadd.s32 %s35, 1
      %s37 = scalar_select %p34, %s35, %s36
      %p40 = pneg %p34
      %p41 = scmp.eq.s32.totalorder %s25, 1
      %p42 = por %p40, %p41
      %p43 = scmp.ne.s32.totalorder %s35, %s38
      %p44 = scmp.eq.s32.totalorder %s25, 0
      %p45 = por %p43, %p44
      %p46 = scmp.ne.s32.totalorder %s35, %s38
      %p47 = scmp.eq.s32.totalorder %s30, 1
      %p48 = por %p46, %p47
      %p49 = scmp.ne.s32.totalorder %s38, %s39
      %p50 = scmp.eq.s32.totalorder %s30, 0
      %p51 = por %p49, %p50
      %p52 = scmp.ne.s32.totalorder %s38, %s39
      %p53 = scmp.eq.s32.totalorder %s31, 1
      %p54 = por %p52, %p53
      %p56 = scmp.ne.s32.totalorder %s39, %s55
      %p57 = scmp.eq.s32.totalorder %s31, 0
      %p58 = por %p56, %p57
      %s60 = sadd.s32 %s59, 1
      %p63 = scmp.eq.s32.totalorder %s25, 1
      %p64 = scmp.ne.s32.totalorder %s59, %s61
      %p65 = scmp.eq.s32.totalorder %s25, 0
      %p66 = por %p64, %p65
      %p67 = scmp.ne.s32.totalorder %s59, %s61
      %p68 = scmp.eq.s32.totalorder %s30, 1
      %p69 = por %p67, %p68
      %p70 = scmp.ne.s32.totalorder %s61, %s62
      %p71 = scmp.eq.s32.totalorder %s30, 0
      %p72 = por %p70, %p71
      %p73 = scmp.ne.s32.totalorder %s61, %s62
      %p74 = scmp.eq.s32.totalorder %s31, 1
      %p75 = por %p73, %p74
      %p77 = scmp.ne.s32.totalorder %s62, %s76
      %p78 = scmp.eq.s32.totalorder %s31, 0
      %p79 = por %p77, %p78
      %s81 = sadd.s32 %s80, 1
      %p84 = scmp.eq.s32.totalorder %s25, 1
      %p85 = scmp.ne.s32.totalorder %s80, %s82
      %p86 = scmp.eq.s32.totalorder %s25, 0
      %p87 = por %p85, %p86
      %p88 = scmp.ne.s32.totalorder %s80, %s82
      %p89 = scmp.eq.s32.totalorder %s30, 1
      %p90 = por %p88, %p89
      %p91 = scmp.ne.s32.totalorder %s82, %s83
      %p92 = scmp.eq.s32.totalorder %s30, 0
      %p93 = por %p91, %p92
      %p94 = scmp.ne.s32.totalorder %s82, %s83
      %p95 = scmp.eq.s32.totalorder %s31, 1
      %p96 = por %p94, %p95
      %p98 = scmp.ne.s32.totalorder %s83, %s97
      %p99 = scmp.eq.s32.totalorder %s31, 0
      %p100 = por %p98, %p99
      %s102 = sadd.s32 %s101, 1
      %p105 = scmp.eq.s32.totalorder %s25, 1
      %p106 = scmp.ne.s32.totalorder %s101, %s103
      %p107 = scmp.eq.s32.totalorder %s25, 0
      %p108 = por %p106, %p107
      %p109 = scmp.ne.s32.totalorder %s101, %s103
      %p110 = scmp.eq.s32.totalorder %s30, 1
      %p111 = por %p109, %p110
      %p112 = scmp.ne.s32.totalorder %s103, %s104
      %p113 = scmp.eq.s32.totalorder %s30, 0
      %p114 = por %p112, %p113
      %p115 = scmp.ne.s32.totalorder %s103, %s104
      %p116 = scmp.eq.s32.totalorder %s31, 1
      %p117 = por %p115, %p116
      %p119 = scmp.ne.s32.totalorder %s104, %s118
      %p120 = scmp.eq.s32.totalorder %s31, 0
      %p121 = por %p119, %p120
      %s123 = sadd.s32 %s122, 1
      %p126 = scmp.eq.s32.totalorder %s25, 1
      %p127 = scmp.ne.s32.totalorder %s122, %s124
      %p128 = scmp.eq.s32.totalorder %s25, 0
      %p129 = por %p127, %p128
      %p130 = scmp.ne.s32.totalorder %s122, %s124
      %p131 = scmp.eq.s32.totalorder %s30, 1
      %p132 = por %p130, %p131
      %p133 = scmp.ne.s32.totalorder %s124, %s125
      %p134 = scmp.eq.s32.totalorder %s30, 0
      %p135 = por %p133, %p134
      %p136 = scmp.ne.s32.totalorder %s124, %s125
      %p137 = scmp.eq.s32.totalorder %s31, 1
      %p138 = por %p136, %p137
      %p140 = scmp.ne.s32.totalorder %s125, %s139
      %p141 = scmp.eq.s32.totalorder %s31, 0
      %p142 = por %p140, %p141
      %s144 = sadd.s32 %s143, 1
      %p147 = scmp.eq.s32.totalorder %s25, 1
      %p148 = scmp.ne.s32.totalorder %s143, %s145
      %p149 = scmp.eq.s32.totalorder %s25, 0
      %p150 = por %p148, %p149
      %p151 = scmp.ne.s32.totalorder %s143, %s145
      %p152 = scmp.eq.s32.totalorder %s30, 1
      %p153 = por %p151, %p152
      %p154 = scmp.ne.s32.totalorder %s145, %s146
      %p155 = scmp.eq.s32.totalorder %s30, 0
      %p156 = por %p154, %p155
      %p157 = scmp.ne.s32.totalorder %s145, %s146
      %p158 = scmp.eq.s32.totalorder %s31, 1
      %p159 = por %p157, %p158
      %p161 = scmp.ne.s32.totalorder %s146, %s160
      %p162 = scmp.eq.s32.totalorder %s31, 0
      %p163 = por %p161, %p162
      %s165 = sadd.s32 %s164, 1
      %p168 = scmp.eq.s32.totalorder %s25, 1
      %p169 = scmp.ne.s32.totalorder %s164, %s166
      %p170 = scmp.eq.s32.totalorder %s25, 0
      %p171 = por %p169, %p170
      %p172 = scmp.ne.s32.totalorder %s164, %s166
      %p173 = scmp.eq.s32.totalorder %s30, 1
      %p174 = por %p172, %p173
      %p175 = scmp.ne.s32.totalorder %s166, %s167
      %p176 = scmp.eq.s32.totalorder %s30, 0
      %p177 = por %p175, %p176
      %p178 = scmp.ne.s32.totalorder %s166, %s167
      %p179 = scmp.eq.s32.totalorder %s31, 1
      %p180 = por %p178, %p179
      %p182 = scmp.ne.s32.totalorder %s167, %s181
      %p183 = scmp.eq.s32.totalorder %s31, 0
      %p184 = por %p182, %p183
      %s186 = sadd.s32 %s185, 1
      %p189 = scmp.eq.s32.totalorder %s25, 1
      %p190 = scmp.ne.s32.totalorder %s185, %s187
      %p191 = scmp.eq.s32.totalorder %s25, 0
      %p192 = por %p190, %p191
      %p193 = scmp.ne.s32.totalorder %s185, %s187
      %p194 = scmp.eq.s32.totalorder %s30, 1
      %p195 = por %p193, %p194
      %p196 = scmp.ne.s32.totalorder %s187, %s188
      %p197 = scmp.eq.s32.totalorder %s30, 0
      %p198 = por %p196, %p197
      %p199 = scmp.ne.s32.totalorder %s187, %s188
      %p200 = scmp.eq.s32.totalorder %s31, 1
      %p201 = por %p199, %p200
      %p203 = scmp.ne.s32.totalorder %s188, %s202
      %p204 = scmp.eq.s32.totalorder %s31, 0
      %p205 = por %p203, %p204
      %s207 = sadd.s32 %s206, 1
      %p210 = scmp.eq.s32.totalorder %s25, 1
      %p211 = scmp.ne.s32.totalorder %s206, %s208
      %p212 = scmp.eq.s32.totalorder %s25, 0
      %p213 = por %p211, %p212
      %p214 = scmp.ne.s32.totalorder %s206, %s208
      %p215 = scmp.eq.s32.totalorder %s30, 1
      %p216 = por %p214, %p215
      %p217 = scmp.ne.s32.totalorder %s208, %s209
      %p218 = scmp.eq.s32.totalorder %s30, 0
      %p219 = por %p217, %p218
      %p220 = scmp.ne.s32.totalorder %s208, %s209
      %p221 = scmp.eq.s32.totalorder %s31, 1
      %p222 = por %p220, %p221
      %p224 = scmp.ne.s32.totalorder %s209, %s223
      %p225 = scmp.eq.s32.totalorder %s31, 0
      %p226 = por %p224, %p225
      %s228 = sadd.s32 %s227, 1
      %p231 = scmp.eq.s32.totalorder %s25, 1
      %p232 = scmp.ne.s32.totalorder %s227, %s229
      %p233 = scmp.eq.s32.totalorder %s25, 0
      %p234 = por %p232, %p233
      %p235 = scmp.ne.s32.totalorder %s227, %s229
      %p236 = scmp.eq.s32.totalorder %s30, 1
      %p237 = por %p235, %p236
      %p238 = scmp.ne.s32.totalorder %s229, %s230
      %p239 = scmp.eq.s32.totalorder %s30, 0
      %p240 = por %p238, %p239
      %p241 = scmp.ne.s32.totalorder %s229, %s230
      %p242 = scmp.eq.s32.totalorder %s31, 1
      %p243 = por %p241, %p242
      %p245 = scmp.ne.s32.totalorder %s230, %s244
      %p246 = scmp.eq.s32.totalorder %s31, 0
      %p247 = por %p245, %p246
      %s249 = sadd.s32 %s248, 1
      %p252 = scmp.eq.s32.totalorder %s25, 1
      %p253 = scmp.ne.s32.totalorder %s248, %s250
      %p254 = scmp.eq.s32.totalorder %s25, 0
      %p255 = por %p253, %p254
      %p256 = scmp.ne.s32.totalorder %s248, %s250
      %p257 = scmp.eq.s32.totalorder %s30, 1
      %p258 = por %p256, %p257
      %p259 = scmp.ne.s32.totalorder %s250, %s251
      %p260 = scmp.eq.s32.totalorder %s30, 0
      %p261 = por %p259, %p260
      %p262 = scmp.ne.s32.totalorder %s250, %s251
      %p263 = scmp.eq.s32.totalorder %s31, 1
      %p264 = por %p262, %p263
      %p266 = scmp.ne.s32.totalorder %s251, %s265
      %p267 = scmp.eq.s32.totalorder %s31, 0
      %p268 = por %p266, %p267
      %s270 = sadd.s32 %s269, 1
      %p273 = scmp.eq.s32.totalorder %s25, 1
      %p274 = scmp.ne.s32.totalorder %s269, %s271
      %p275 = scmp.eq.s32.totalorder %s25, 0
      %p276 = por %p274, %p275
      %p277 = scmp.ne.s32.totalorder %s269, %s271
      %p278 = scmp.eq.s32.totalorder %s30, 1
      %p279 = por %p277, %p278
      %p280 = scmp.ne.s32.totalorder %s271, %s272
      %p281 = scmp.eq.s32.totalorder %s30, 0
      %p282 = por %p280, %p281
      %p283 = scmp.ne.s32.totalorder %s271, %s272
      %p284 = scmp.eq.s32.totalorder %s31, 1
      %p285 = por %p283, %p284
      %p287 = scmp.ne.s32.totalorder %s272, %s286
      %p288 = scmp.eq.s32.totalorder %s31, 0
      %p289 = por %p287, %p288
      %s291 = sadd.s32 %s290, 1
      %p294 = scmp.eq.s32.totalorder %s25, 1
      %p295 = scmp.ne.s32.totalorder %s290, %s292
      %p296 = scmp.eq.s32.totalorder %s25, 0
      %p297 = por %p295, %p296
      %p298 = scmp.ne.s32.totalorder %s290, %s292
      %p299 = scmp.eq.s32.totalorder %s30, 1
      %p300 = por %p298, %p299
      %p301 = scmp.ne.s32.totalorder %s292, %s293
      %p302 = scmp.eq.s32.totalorder %s30, 0
      %p303 = por %p301, %p302
      %p304 = scmp.ne.s32.totalorder %s292, %s293
      %p305 = scmp.eq.s32.totalorder %s31, 1
      %p306 = por %p304, %p305
      %p308 = scmp.ne.s32.totalorder %s293, %s307
      %p309 = scmp.eq.s32.totalorder %s31, 0
      %p310 = por %p308, %p309
      %s312 = sadd.s32 %s311, 1
      %p315 = scmp.eq.s32.totalorder %s25, 1
      %p316 = scmp.ne.s32.totalorder %s311, %s313
      %p317 = scmp.eq.s32.totalorder %s25, 0
      %p318 = por %p316, %p317
      %p319 = scmp.ne.s32.totalorder %s311, %s313
      %p320 = scmp.eq.s32.totalorder %s30, 1
      %p321 = por %p319, %p320
      %p322 = scmp.ne.s32.totalorder %s313, %s314
      %p323 = scmp.eq.s32.totalorder %s30, 0
      %p324 = por %p322, %p323
      %p325 = scmp.ne.s32.totalorder %s313, %s314
      %p326 = scmp.eq.s32.totalorder %s31, 1
      %p327 = por %p325, %p326
      %p329 = scmp.ne.s32.totalorder %s314, %s328
      %p330 = scmp.eq.s32.totalorder %s31, 0
      %p331 = por %p329, %p330
      %s333 = sadd.s32 %s332, 1
      %p336 = scmp.eq.s32.totalorder %s25, 1
      %p337 = scmp.ne.s32.totalorder %s332, %s334
      %p338 = scmp.eq.s32.totalorder %s25, 0
      %p339 = por %p337, %p338
      %p340 = scmp.ne.s32.totalorder %s332, %s334
      %p341 = scmp.eq.s32.totalorder %s30, 1
      %p342 = por %p340, %p341
      %p343 = scmp.ne.s32.totalorder %s334, %s335
      %p344 = scmp.eq.s32.totalorder %s30, 0
      %p345 = por %p343, %p344
      %p346 = scmp.ne.s32.totalorder %s334, %s335
      %p347 = scmp.eq.s32.totalorder %s31, 1
      %p348 = por %p346, %p347
      %p350 = scmp.ne.s32.totalorder %s335, %s349
      %p351 = scmp.eq.s32.totalorder %s31, 0
      %p352 = por %p350, %p351
      %s354 = sadd.s32 %s353, 1
      %p357 = scmp.eq.s32.totalorder %s25, 1
      %p358 = scmp.ne.s32.totalorder %s353, %s355
      %p359 = scmp.eq.s32.totalorder %s25, 0
      %p360 = por %p358, %p359
      %p361 = scmp.ne.s32.totalorder %s353, %s355
      %p362 = scmp.eq.s32.totalorder %s30, 1
      %p363 = por %p361, %p362
      %p364 = scmp.ne.s32.totalorder %s355, %s356
      %p365 = scmp.eq.s32.totalorder %s30, 0
      %p366 = por %p364, %p365
      %p367 = scmp.ne.s32.totalorder %s355, %s356
      %p368 = scmp.eq.s32.totalorder %s31, 1
      %p369 = por %p367, %p368
      %p371 = scmp.ne.s32.totalorder %s356, %s370
      %p372 = scmp.eq.s32.totalorder %s31, 0
      %p373 = por %p371, %p372
      %s374 = ssub.s32 %s25, %s32
      %p375 = scmp.eq.s32.totalorder %s374, 0
      %s377 = sadd.s32 %s376, 1
      %s378 = scalar_select %p375, %s376, %s377
      %p381 = pneg %p375
      %p382 = scmp.eq.s32.totalorder %s25, 1
      %p383 = por %p381, %p382
      %p384 = scmp.ne.s32.totalorder %s376, %s379
      %p385 = scmp.eq.s32.totalorder %s25, 0
      %p386 = por %p384, %p385
      %p387 = scmp.ne.s32.totalorder %s376, %s379
      %p388 = scmp.eq.s32.totalorder %s30, 1
      %p389 = por %p387, %p388
      %p390 = scmp.ne.s32.totalorder %s379, %s380
      %p391 = scmp.eq.s32.totalorder %s30, 0
      %p392 = por %p390, %p391
      %p393 = scmp.ne.s32.totalorder %s379, %s380
      %p394 = scmp.eq.s32.totalorder %s31, 1
      %p395 = por %p393, %p394
      %p397 = scmp.ne.s32.totalorder %s380, %s396
      %p398 = scmp.eq.s32.totalorder %s31, 0
      %p399 = por %p397, %p398
      %p400 = scmp.le.s32.totalorder 1, %s25
      %p401 = scmp.lt.s32.totalorder %s25, 3
      %p402 = pnand %p400, %p401
      %p403 = pneg %p402
      // Predicated region
      $region9: #{tpu_custom_call.1} parent=5 // pred_check
        _
      $region10: #{tpu_custom_call.1} parent=5 // pred_check_branch
        %405 = sbr.rel (%p402) target = $region12
      $region11: #{tpu_custom_call.1} parent=5 // pred_region
        %s406 = ssub.s32 %s25, 1
        // Predicated region
        $region13: #{tpu_custom_call.1} parent=11 // pred_check
          %p407 = pneg %p72
        $region14: #{tpu_custom_call.1} parent=11 // pred_check_branch
          %409 = sbr.rel (%p407) target = $region16
        $region15: #{tpu_custom_call.1} parent=11 // pred_region
          _
        $region16: #{tpu_custom_call.1} parent=11 // pred_fallthru
          _
        // Predicated region
        $region17: #{tpu_custom_call.1} parent=11 // pred_check
          %p410 = pneg %p93
        $region18: #{tpu_custom_call.1} parent=11 // pred_check_branch
          %412 = sbr.rel (%p410) target = $region20
        $region19: #{tpu_custom_call.1} parent=11 // pred_region
          _
        $region20: #{tpu_custom_call.1} parent=11 // pred_fallthru
          _
        // Predicated region
        $region21: #{tpu_custom_call.1} parent=11 // pred_check
          %p413 = pneg %p114
        $region22: #{tpu_custom_call.1} parent=11 // pred_check_branch
          %415 = sbr.rel (%p413) target = $region24
        $region23: #{tpu_custom_call.1} parent=11 // pred_region
          _
        $region24: #{tpu_custom_call.1} parent=11 // pred_fallthru
          _
        // Predicated region
        $region25: #{tpu_custom_call.1} parent=11 // pred_check
          %p416 = pneg %p135
        $region26: #{tpu_custom_call.1} parent=11 // pred_check_branch
          %418 = sbr.rel (%p416) target = $region28
        $region27: #{tpu_custom_call.1} parent=11 // pred_region
          _
        $region28: #{tpu_custom_call.1} parent=11 // pred_fallthru
          _
        // Predicated region
        $region29: #{tpu_custom_call.1} parent=11 // pred_check
          %p419 = pneg %p156
        $region30: #{tpu_custom_call.1} parent=11 // pred_check_branch
          %421 = sbr.rel (%p419) target = $region32
        $region31: #{tpu_custom_call.1} parent=11 // pred_region
          _
        $region32: #{tpu_custom_call.1} parent=11 // pred_fallthru
          _
        // Predicated region
        $region33: #{tpu_custom_call.1} parent=11 // pred_check
          %p422 = pneg %p177
        $region34: #{tpu_custom_call.1} parent=11 // pred_check_branch
          %424 = sbr.rel (%p422) target = $region36
        $region35: #{tpu_custom_call.1} parent=11 // pred_region
          _
        $region36: #{tpu_custom_call.1} parent=11 // pred_fallthru
          _
        // Predicated region
        $region37: #{tpu_custom_call.1} parent=11 // pred_check
          %p425 = pneg %p198
        $region38: #{tpu_custom_call.1} parent=11 // pred_check_branch
          %427 = sbr.rel (%p425) target = $region40
        $region39: #{tpu_custom_call.1} parent=11 // pred_region
          _
        $region40: #{tpu_custom_call.1} parent=11 // pred_fallthru
          _
        // Predicated region
        $region41: #{tpu_custom_call.1} parent=11 // pred_check
          %p428 = pneg %p219
        $region42: #{tpu_custom_call.1} parent=11 // pred_check_branch
          %430 = sbr.rel (%p428) target = $region44
        $region43: #{tpu_custom_call.1} parent=11 // pred_region
          _
        $region44: #{tpu_custom_call.1} parent=11 // pred_fallthru
          _
        // Predicated region
        $region45: #{tpu_custom_call.1} parent=11 // pred_check
          %p431 = pneg %p240
        $region46: #{tpu_custom_call.1} parent=11 // pred_check_branch
          %433 = sbr.rel (%p431) target = $region48
        $region47: #{tpu_custom_call.1} parent=11 // pred_region
          _
        $region48: #{tpu_custom_call.1} parent=11 // pred_fallthru
          _
        // Predicated region
        $region49: #{tpu_custom_call.1} parent=11 // pred_check
          %p434 = pneg %p261
        $region50: #{tpu_custom_call.1} parent=11 // pred_check_branch
          %436 = sbr.rel (%p434) target = $region52
        $region51: #{tpu_custom_call.1} parent=11 // pred_region
          _
        $region52: #{tpu_custom_call.1} parent=11 // pred_fallthru
          _
        // Predicated region
        $region53: #{tpu_custom_call.1} parent=11 // pred_check
          %p437 = pneg %p282
        $region54: #{tpu_custom_call.1} parent=11 // pred_check_branch
          %439 = sbr.rel (%p437) target = $region56
        $region55: #{tpu_custom_call.1} parent=11 // pred_region
          _
        $region56: #{tpu_custom_call.1} parent=11 // pred_fallthru
          _
        // Predicated region
        $region57: #{tpu_custom_call.1} parent=11 // pred_check
          %p440 = pneg %p303
        $region58: #{tpu_custom_call.1} parent=11 // pred_check_branch
          %442 = sbr.rel (%p440) target = $region60
        $region59: #{tpu_custom_call.1} parent=11 // pred_region
          _
        $region60: #{tpu_custom_call.1} parent=11 // pred_fallthru
          _
        // Predicated region
        $region61: #{tpu_custom_call.1} parent=11 // pred_check
          %p443 = pneg %p324
        $region62: #{tpu_custom_call.1} parent=11 // pred_check_branch
          %445 = sbr.rel (%p443) target = $region64
        $region63: #{tpu_custom_call.1} parent=11 // pred_region
          _
        $region64: #{tpu_custom_call.1} parent=11 // pred_fallthru
          _
        // Predicated region
        $region65: #{tpu_custom_call.1} parent=11 // pred_check
          %p446 = pneg %p345
        $region66: #{tpu_custom_call.1} parent=11 // pred_check_branch
          %448 = sbr.rel (%p446) target = $region68
        $region67: #{tpu_custom_call.1} parent=11 // pred_region
          _
        $region68: #{tpu_custom_call.1} parent=11 // pred_fallthru
          _
        // Predicated region
        $region69: #{tpu_custom_call.1} parent=11 // pred_check
          %p449 = pneg %p366
        $region70: #{tpu_custom_call.1} parent=11 // pred_check_branch
          %451 = sbr.rel (%p449) target = $region72
        $region71: #{tpu_custom_call.1} parent=11 // pred_region
          _
        $region72: #{tpu_custom_call.1} parent=11 // pred_fallthru
          _
      $region12: #{tpu_custom_call.1} parent=5 // pred_fallthru
        _
      %p452 = scmp.lt.s32.totalorder %s25, 2
      // Predicated region
      $region73: #{tpu_custom_call.1} parent=5 // pred_check
        %p453 = pneg %p452
      $region74: #{tpu_custom_call.1} parent=5 // pred_check_branch
        %455 = sbr.rel (%p453) target = $region76
      $region75: #{tpu_custom_call.1} parent=5 // pred_region
        // Predicated region
        $region77: #{tpu_custom_call.1} parent=75 // pred_check
          %p456 = pneg %p45
        $region78: #{tpu_custom_call.1} parent=75 // pred_check_branch
          %458 = sbr.rel (%p456) target = $region80
        $region79: #{tpu_custom_call.1} parent=75 // pred_region
          %p459 = scmp.lt.s32.totalorder %s25, 1
          %s460 = scalar_select %p459, %s25, 1
          %s461 = smul.addr %s460, 8
          %s462 = scalar_lea.vmem %s0, %s461
        $region80: #{tpu_custom_call.1} parent=75 // pred_fallthru
          _
      $region76: #{tpu_custom_call.1} parent=5 // pred_fallthru
        _
      %p463 = scmp.le.s32.totalorder 1, %s25
      %p464 = scmp.lt.s32.totalorder %s25, 3
      %p465 = pnand %p463, %p464
      %p466 = pneg %p465
      // Predicated region
      $region81: #{tpu_custom_call.1} parent=5 // pred_check
        _
      $region82: #{tpu_custom_call.1} parent=5 // pred_check_branch
        %468 = sbr.rel (%p465) target = $region84
      $region83: #{tpu_custom_call.1} parent=5 // pred_region
        %s469 = ssub.s32 %s25, 1
        %p470 = scmp.lt.s32.totalorder %s30, 1
        %s471 = scalar_select %p470, %s30, 1
        %s472 = smul.addr %s471, 8
        %s473 = scalar_lea.vmem %s0, %s472
        %p474 = pneg %p51
        %p475 = pneg %p48
        %p476 = pneg %p72
        %p477 = pneg %p69
        %p478 = pneg %p93
        %p479 = pneg %p90
        %p480 = pneg %p114
        %p481 = pneg %p111
        %p482 = pneg %p135
        %p483 = pneg %p132
        %p484 = pneg %p156
        %p485 = pneg %p153
        %p486 = pneg %p177
        %p487 = pneg %p174
        %p488 = pneg %p198
        %p489 = pneg %p195
        %p490 = pneg %p219
        %p491 = pneg %p216
        %p492 = pneg %p240
        %p493 = pneg %p237
        %p494 = pneg %p261
        %p495 = pneg %p258
        %p496 = pneg %p282
        %p497 = pneg %p279
        %p498 = pneg %p303
        %p499 = pneg %p300
        %p500 = pneg %p324
        %p501 = pneg %p321
        %p502 = pneg %p345
        %p503 = pneg %p342
        %p504 = pneg %p366
        %p505 = pneg %p363
        %p506 = pneg %p392
        %p507 = pneg %p389
        %s508 = sand.u32 %s379, 1
        %s509 = scalar_lea.sflag [#allocation3], %s508
        %s510 = sand.u32 %s379, 1
        %s511 = smul.addr %s510, 8
        %s512 = scalar_lea.vmem [#allocation2], %s511
        %p513 = scmp.lt.s32.totalorder %s30, 1
        %s514 = scalar_select %p513, %s30, 1
        %s515 = smul.addr %s514, 8
        %s516 = scalar_lea.vmem %s0, %s515
        %v518 = vld [vmem:[%s516] sm:$0xff]
        %v519 = vld [vmem:[%s1] sm:$0xff]
        %v520 = vxor.u32 %v519, 2147483648
        %v521 = vmul.f32 %v520, 1.442695
        %v522 = vpow.pop %v521
        %v523 = vadd.f32 %v522, 1.0
        %v524 = vrcp.pop %v523
        %v525 = vmul.f32 1.0, %v524
        %v526 = vmul.f32 %v519, %v525
        %v527 = vpack.c.bf16 %v526, %v526
        %v528 = vld [vmem:[%s2] sm:$0xf]
        %v529 = vld [vmem:[%s2 + $0x4] sm:$0xf]
        %v530 = vld [vmem:[%s2 + $0x8] sm:$0xf]
        %v531 = vld [vmem:[%s2 + $0xc] sm:$0xf]
        %v532 = vld [vmem:[%s3] sm:$0x1]
        %v533 = vlaneseq
        %v534 = vshrl.u32 %v533, 7
        %v535 = vsub.s32 0, %v534
        %v536 = vrot.slane %v532, %v535
        %v541 = vunpack.c.l.b16 %v528
        %v542 = vunpack.c.l.b16 %v529
        %v543 = vunpack.c.l.b16 %v530
        %v544 = vunpack.c.l.b16 %v531
        %v545 = vpack.c.b16 %v542, %v541
        %v546 = vpack.c.b16 %v544, %v543
        %vm549 = vcmask 261120
        %v551 = vsel %vm549, %v527, 0
        %553 = vmatprep.subr.bf16.mxu0 0
        %554 = vmatpush1.bf16.msra.mxu0 %v545
        %555 = vmatprep.subr.bf16.mxu0 0
        %556 = vmatpush1.bf16.msra.mxu0 %v546
        %557 = vmatprep.subr.bf16.mxu0 0
        %558 = vmatpush1.bf16.msra.mxu0 0
        %559 = vmatprep.subr.bf16.mxu0 0
        %560 = vmatpush1.bf16.msra.mxu0 0
        %561 = vmatprep.subr.bf16.mxu0 0
        %562 = vmatpush1.bf16.msra.mxu0 0
        %563 = vmatprep.subr.bf16.mxu0 0
        %564 = vmatpush1.bf16.msra.mxu0 0
        %565 = vmatprep.subr.bf16.mxu0 0
        %566 = vmatpush1.bf16.msra.mxu0 0
        %567 = vmatprep.subr.bf16.mxu0 0
        %568 = vmatpush1.bf16.msra.mxu0 0
        %569 = vmatprep.subr.bf16.mxu0 0
        %570 = vmatpush1.bf16.msra.mxu0 0
        %571 = vmatprep.subr.bf16.mxu0 0
        %572 = vmatpush1.bf16.msra.mxu0 0
        %573 = vmatprep.subr.bf16.mxu0 0
        %574 = vmatpush1.bf16.msra.mxu0 0
        %575 = vmatprep.subr.bf16.mxu0 0
        %576 = vmatpush1.bf16.msra.mxu0 0
        %577 = vmatprep.subr.bf16.mxu0 0
        %578 = vmatpush1.bf16.msra.mxu0 0
        %579 = vmatprep.subr.bf16.mxu0 0
        %580 = vmatpush1.bf16.msra.mxu0 0
        %581 = vmatprep.subr.bf16.mxu0 0
        %582 = vmatpush1.bf16.msra.mxu0 0
        %583 = vmatprep.subr.bf16.mxu0 0
        %584 = vmatpush1.bf16.msra.mxu0 0
        %585 = vmatprep.mubr.bf16.mxu0 0
        %586 = vmatmul.mubr.bf16.gmra.mrb[0].mxu0 %v551
        %v587 = vpop.f32.mrb[0].mxu0
        %v588 = vadd.f32 %v536, %v587
        %v589 = vpop.f32.mrb[0].mxu0
        %v590 = vpop.f32.mrb[0].mxu0
        %v591 = vpop.f32.mrb[0].mxu0
        %592 = vdwg.mxu0
        %s593 = scalar_lea.vmem %s2, 16
        %v594 = vld [vmem:[%s593] sm:$0xf]
        %v595 = vld [vmem:[%s593 + $0x4] sm:$0xf]
        %v596 = vld [vmem:[%s593 + $0x8] sm:$0xf]
        %v597 = vld [vmem:[%s593 + $0xc] sm:$0xf]
        %v598 = vld [vmem:[%s3 + $0x1] sm:$0x1]
        %v599 = vlaneseq
        %v600 = vshrl.u32 %v599, 7
        %v601 = vsub.s32 0, %v600
        %v602 = vrot.slane %v598, %v601
        %v607 = vunpack.c.l.b16 %v594
        %v608 = vunpack.c.l.b16 %v595
        %v609 = vunpack.c.l.b16 %v596
        %v610 = vunpack.c.l.b16 %v597
        %v611 = vpack.c.b16 %v608, %v607
        %v612 = vpack.c.b16 %v610, %v609
        %615 = vmatprep.subr.bf16.mxu0 0
        %616 = vmatpush1.bf16.msra.mxu0 %v611
        %617 = vmatprep.subr.bf16.mxu0 0
        %618 = vmatpush1.bf16.msra.mxu0 %v612
        %619 = vmatprep.subr.bf16.mxu0 0
        %620 = vmatpush1.bf16.msra.mxu0 0
        %621 = vmatprep.subr.bf16.mxu0 0
        %622 = vmatpush1.bf16.msra.mxu0 0
        %623 = vmatprep.subr.bf16.mxu0 0
        %624 = vmatpush1.bf16.msra.mxu0 0
        %625 = vmatprep.subr.bf16.mxu0 0
        %626 = vmatpush1.bf16.msra.mxu0 0
        %627 = vmatprep.subr.bf16.mxu0 0
        %628 = vmatpush1.bf16.msra.mxu0 0
        %629 = vmatprep.subr.bf16.mxu0 0
        %630 = vmatpush1.bf16.msra.mxu0 0
        %631 = vmatprep.subr.bf16.mxu0 0
        %632 = vmatpush1.bf16.msra.mxu0 0
        %633 = vmatprep.subr.bf16.mxu0 0
        %634 = vmatpush1.bf16.msra.mxu0 0
        %635 = vmatprep.subr.bf16.mxu0 0
        %636 = vmatpush1.bf16.msra.mxu0 0
        %637 = vmatprep.subr.bf16.mxu0 0
        %638 = vmatpush1.bf16.msra.mxu0 0
        %639 = vmatprep.subr.bf16.mxu0 0
        %640 = vmatpush1.bf16.msra.mxu0 0
        %641 = vmatprep.subr.bf16.mxu0 0
        %642 = vmatpush1.bf16.msra.mxu0 0
        %643 = vmatprep.subr.bf16.mxu0 0
        %644 = vmatpush1.bf16.msra.mxu0 0
        %645 = vmatprep.subr.bf16.mxu0 0
        %646 = vmatpush1.bf16.msra.mxu0 0
        %647 = vmatprep.mubr.bf16.mxu0 0
        %648 = vmatmul.mubr.bf16.gmra.mrb[0].mxu0 %v551
        %v649 = vpop.f32.mrb[0].mxu0
        %v650 = vadd.f32 %v602, %v649
        %v651 = vpop.f32.mrb[0].mxu0
        %v652 = vpop.f32.mrb[0].mxu0
        %v653 = vpop.f32.mrb[0].mxu0
        %654 = vdwg.mxu0
        %s655 = scalar_lea.vmem %s2, 32
        %v656 = vld [vmem:[%s655] sm:$0xf]
        %v657 = vld [vmem:[%s655 + $0x4] sm:$0xf]
        %v658 = vld [vmem:[%s655 + $0x8] sm:$0xf]
        %v659 = vld [vmem:[%s655 + $0xc] sm:$0xf]
        %v660 = vld [vmem:[%s3 + $0x2] sm:$0x1]
        %v661 = vlaneseq
        %v662 = vshrl.u32 %v661, 7
        %v663 = vsub.s32 0, %v662
        %v664 = vrot.slane %v660, %v663
        %v669 = vunpack.c.l.b16 %v656
        %v670 = vunpack.c.l.b16 %v657
        %v671 = vunpack.c.l.b16 %v658
        %v672 = vunpack.c.l.b16 %v659
        %v673 = vpack.c.b16 %v670, %v669
        %v674 = vpack.c.b16 %v672, %v671
        %677 = vmatprep.subr.bf16.mxu0 0
        %678 = vmatpush1.bf16.msra.mxu0 %v673
        %679 = vmatprep.subr.bf16.mxu0 0
        %680 = vmatpush1.bf16.msra.mxu0 %v674
        %681 = vmatprep.subr.bf16.mxu0 0
        %682 = vmatpush1.bf16.msra.mxu0 0
        %683 = vmatprep.subr.bf16.mxu0 0
        %684 = vmatpush1.bf16.msra.mxu0 0
        %685 = vmatprep.subr.bf16.mxu0 0
        %686 = vmatpush1.bf16.msra.mxu0 0
        %687 = vmatprep.subr.bf16.mxu0 0
        %688 = vmatpush1.bf16.msra.mxu0 0
        %689 = vmatprep.subr.bf16.mxu0 0
        %690 = vmatpush1.bf16.msra.mxu0 0
        %691 = vmatprep.subr.bf16.mxu0 0
        %692 = vmatpush1.bf16.msra.mxu0 0
        %693 = vmatprep.subr.bf16.mxu0 0
        %694 = vmatpush1.bf16.msra.mxu0 0
        %695 = vmatprep.subr.bf16.mxu0 0
        %696 = vmatpush1.bf16.msra.mxu0 0
        %697 = vmatprep.subr.bf16.mxu0 0
        %698 = vmatpush1.bf16.msra.mxu0 0
        %699 = vmatprep.subr.bf16.mxu0 0
        %700 = vmatpush1.bf16.msra.mxu0 0
        %701 = vmatprep.subr.bf16.mxu0 0
        %702 = vmatpush1.bf16.msra.mxu0 0
        %703 = vmatprep.subr.bf16.mxu0 0
        %704 = vmatpush1.bf16.msra.mxu0 0
        %705 = vmatprep.subr.bf16.mxu0 0
        %706 = vmatpush1.bf16.msra.mxu0 0
        %707 = vmatprep.subr.bf16.mxu0 0
        %708 = vmatpush1.bf16.msra.mxu0 0
        %709 = vmatprep.mubr.bf16.mxu0 0
        %710 = vmatmul.mubr.bf16.gmra.mrb[0].mxu0 %v551
        %v711 = vpop.f32.mrb[0].mxu0
        %v712 = vadd.f32 %v664, %v711
        %v713 = vpop.f32.mrb[0].mxu0
        %v714 = vpop.f32.mrb[0].mxu0
        %v715 = vpop.f32.mrb[0].mxu0
        %716 = vdwg.mxu0
        %s717 = scalar_lea.vmem %s2, 48
        %v718 = vld [vmem:[%s717] sm:$0xf]
        %v719 = vld [vmem:[%s717 + $0x4] sm:$0xf]
        %v720 = vld [vmem:[%s717 + $0x8] sm:$0xf]
        %v721 = vld [vmem:[%s717 + $0xc] sm:$0xf]
        %v722 = vld [vmem:[%s3 + $0x3] sm:$0x1]
        %v723 = vlaneseq
        %v724 = vshrl.u32 %v723, 7
        %v725 = vsub.s32 0, %v724
        %v726 = vrot.slane %v722, %v725
        %v731 = vunpack.c.l.b16 %v718
        %v732 = vunpack.c.l.b16 %v719
        %v733 = vunpack.c.l.b16 %v720
        %v734 = vunpack.c.l.b16 %v721
        %v735 = vpack.c.b16 %v732, %v731
        %v736 = vpack.c.b16 %v734, %v733
        %739 = vmatprep.subr.bf16.mxu0 0
        %740 = vmatpush1.bf16.msra.mxu0 %v735
        %741 = vmatprep.subr.bf16.mxu0 0
        %742 = vmatpush1.bf16.msra.mxu0 %v736
        %743 = vmatprep.subr.bf16.mxu0 0
        %744 = vmatpush1.bf16.msra.mxu0 0
        %745 = vmatprep.subr.bf16.mxu0 0
        %746 = vmatpush1.bf16.msra.mxu0 0
        %747 = vmatprep.subr.bf16.mxu0 0
        %748 = vmatpush1.bf16.msra.mxu0 0
        %749 = vmatprep.subr.bf16.mxu0 0
        %750 = vmatpush1.bf16.msra.mxu0 0
        %751 = vmatprep.subr.bf16.mxu0 0
        %752 = vmatpush1.bf16.msra.mxu0 0
        %753 = vmatprep.subr.bf16.mxu0 0
        %754 = vmatpush1.bf16.msra.mxu0 0
        %755 = vmatprep.subr.bf16.mxu0 0
        %756 = vmatpush1.bf16.msra.mxu0 0
        %757 = vmatprep.subr.bf16.mxu0 0
        %758 = vmatpush1.bf16.msra.mxu0 0
        %759 = vmatprep.subr.bf16.mxu0 0
        %760 = vmatpush1.bf16.msra.mxu0 0
        %761 = vmatprep.subr.bf16.mxu0 0
        %762 = vmatpush1.bf16.msra.mxu0 0
        %763 = vmatprep.subr.bf16.mxu0 0
        %764 = vmatpush1.bf16.msra.mxu0 0
        %765 = vmatprep.subr.bf16.mxu0 0
        %766 = vmatpush1.bf16.msra.mxu0 0
        %767 = vmatprep.subr.bf16.mxu0 0
        %768 = vmatpush1.bf16.msra.mxu0 0
        %769 = vmatprep.subr.bf16.mxu0 0
        %770 = vmatpush1.bf16.msra.mxu0 0
        %771 = vmatprep.mubr.bf16.mxu0 0
        %772 = vmatmul.mubr.bf16.gmra.mrb[0].mxu0 %v551
        %v773 = vpop.f32.mrb[0].mxu0
        %v774 = vadd.f32 %v726, %v773
        %v775 = vpop.f32.mrb[0].mxu0
        %v776 = vpop.f32.mrb[0].mxu0
        %v777 = vpop.f32.mrb[0].mxu0
        %778 = vdwg.mxu0
        %s779 = scalar_lea.vmem %s2, 64
        %v780 = vld [vmem:[%s779] sm:$0xf]
        %v781 = vld [vmem:[%s779 + $0x4] sm:$0xf]
        %v782 = vld [vmem:[%s779 + $0x8] sm:$0xf]
        %v783 = vld [vmem:[%s779 + $0xc] sm:$0xf]
        %v784 = vld [vmem:[%s3 + $0x4] sm:$0x1]
        %v785 = vlaneseq
        %v786 = vshrl.u32 %v785, 7
        %v787 = vsub.s32 0, %v786
        %v788 = vrot.slane %v784, %v787
        %v793 = vunpack.c.l.b16 %v780
        %v794 = vunpack.c.l.b16 %v781
        %v795 = vunpack.c.l.b16 %v782
        %v796 = vunpack.c.l.b16 %v783
        %v797 = vpack.c.b16 %v794, %v793
        %v798 = vpack.c.b16 %v796, %v795
        %801 = vmatprep.subr.bf16.mxu0 0
        %802 = vmatpush1.bf16.msra.mxu0 %v797
        %803 = vmatprep.subr.bf16.mxu0 0
        %804 = vmatpush1.bf16.msra.mxu0 %v798
        %805 = vmatprep.subr.bf16.mxu0 0
        %806 = vmatpush1.bf16.msra.mxu0 0
        %807 = vmatprep.subr.bf16.mxu0 0
        %808 = vmatpush1.bf16.msra.mxu0 0
        %809 = vmatprep.subr.bf16.mxu0 0
        %810 = vmatpush1.bf16.msra.mxu0 0
        %811 = vmatprep.subr.bf16.mxu0 0
        %812 = vmatpush1.bf16.msra.mxu0 0
        %813 = vmatprep.subr.bf16.mxu0 0
        %814 = vmatpush1.bf16.msra.mxu0 0
        %815 = vmatprep.subr.bf16.mxu0 0
        %816 = vmatpush1.bf16.msra.mxu0 0
        %817 = vmatprep.subr.bf16.mxu0 0
        %818 = vmatpush1.bf16.msra.mxu0 0
        %819 = vmatprep.subr.bf16.mxu0 0
        %820 = vmatpush1.bf16.msra.mxu0 0
        %821 = vmatprep.subr.bf16.mxu0 0
        %822 = vmatpush1.bf16.msra.mxu0 0
        %823 = vmatprep.subr.bf16.mxu0 0
        %824 = vmatpush1.bf16.msra.mxu0 0
        %825 = vmatprep.subr.bf16.mxu0 0
        %826 = vmatpush1.bf16.msra.mxu0 0
        %827 = vmatprep.subr.bf16.mxu0 0
        %828 = vmatpush1.bf16.msra.mxu0 0
        %829 = vmatprep.subr.bf16.mxu0 0
        %830 = vmatpush1.bf16.msra.mxu0 0
        %831 = vmatprep.subr.bf16.mxu0 0
        %832 = vmatpush1.bf16.msra.mxu0 0
        %833 = vmatprep.mubr.bf16.mxu0 0
        %834 = vmatmul.mubr.bf16.gmra.mrb[0].mxu0 %v551
        %v835 = vpop.f32.mrb[0].mxu0
        %v836 = vadd.f32 %v788, %v835
        %v837 = vpop.f32.mrb[0].mxu0
        %v838 = vpop.f32.mrb[0].mxu0
        %v839 = vpop.f32.mrb[0].mxu0
        %840 = vdwg.mxu0
        %s841 = scalar_lea.vmem %s2, 80
        %v842 = vld [vmem:[%s841] sm:$0xf]
        %v843 = vld [vmem:[%s841 + $0x4] sm:$0xf]
        %v844 = vld [vmem:[%s841 + $0x8] sm:$0xf]
        %v845 = vld [vmem:[%s841 + $0xc] sm:$0xf]
        %v846 = vld [vmem:[%s3 + $0x5] sm:$0x1]
        %v847 = vlaneseq
        %v848 = vshrl.u32 %v847, 7
        %v849 = vsub.s32 0, %v848
        %v850 = vrot.slane %v846, %v849
        %v855 = vunpack.c.l.b16 %v842
        %v856 = vunpack.c.l.b16 %v843
        %v857 = vunpack.c.l.b16 %v844
        %v858 = vunpack.c.l.b16 %v845
        %v859 = vpack.c.b16 %v856, %v855
        %v860 = vpack.c.b16 %v858, %v857
        %863 = vmatprep.subr.bf16.mxu0 0
        %864 = vmatpush1.bf16.msra.mxu0 %v859
        %865 = vmatprep.subr.bf16.mxu0 0
        %866 = vmatpush1.bf16.msra.mxu0 %v860
        %867 = vmatprep.subr.bf16.mxu0 0
        %868 = vmatpush1.bf16.msra.mxu0 0
        %869 = vmatprep.subr.bf16.mxu0 0
        %870 = vmatpush1.bf16.msra.mxu0 0
        %871 = vmatprep.subr.bf16.mxu0 0
        %872 = vmatpush1.bf16.msra.mxu0 0
        %873 = vmatprep.subr.bf16.mxu0 0
        %874 = vmatpush1.bf16.msra.mxu0 0
        %875 = vmatprep.subr.bf16.mxu0 0
        %876 = vmatpush1.bf16.msra.mxu0 0
        %877 = vmatprep.subr.bf16.mxu0 0
        %878 = vmatpush1.bf16.msra.mxu0 0
        %879 = vmatprep.subr.bf16.mxu0 0
        %880 = vmatpush1.bf16.msra.mxu0 0
        %881 = vmatprep.subr.bf16.mxu0 0
        %882 = vmatpush1.bf16.msra.mxu0 0
        %883 = vmatprep.subr.bf16.mxu0 0
        %884 = vmatpush1.bf16.msra.mxu0 0
        %885 = vmatprep.subr.bf16.mxu0 0
        %886 = vmatpush1.bf16.msra.mxu0 0
        %887 = vmatprep.subr.bf16.mxu0 0
        %888 = vmatpush1.bf16.msra.mxu0 0
        %889 = vmatprep.subr.bf16.mxu0 0
        %890 = vmatpush1.bf16.msra.mxu0 0
        %891 = vmatprep.subr.bf16.mxu0 0
        %892 = vmatpush1.bf16.msra.mxu0 0
        %893 = vmatprep.subr.bf16.mxu0 0
        %894 = vmatpush1.bf16.msra.mxu0 0
        %895 = vmatprep.mubr.bf16.mxu0 0
        %896 = vmatmul.mubr.bf16.gmra.mrb[0].mxu0 %v551
        %v897 = vpop.f32.mrb[0].mxu0
        %v898 = vadd.f32 %v850, %v897
        %v899 = vpop.f32.mrb[0].mxu0
        %v900 = vpop.f32.mrb[0].mxu0
        %v901 = vpop.f32.mrb[0].mxu0
        %902 = vdwg.mxu0
        %v903 = vsel %vm549, %v518, 0.0
        %904 = vadd.xlane.f32.xlu0 %v903
        %v905 = vpop.xlane.xlu0 %904
        %v906 = vrcp.pop 32.0
        %v907 = vmul.f32 %v905, %v906
        %v908 = vsub.f32 %v518, %v907
        %v909 = vmul.f32 %v908, %v908
        %v910 = vsel %vm549, %v909, 0.0
        %911 = vadd.xlane.f32.xlu0 %v910
        %v912 = vpop.xlane.xlu0 %911
        %v913 = vmul.f32 %v912, %v906
        %v914 = vadd.f32 %v913, 1e-06
        %v915 = vrsqrt.pop %v914
        %v916 = vmul.f32 %v908, %v915
        %v917 = vadd.f32 %v650, 1.0
        %v918 = vmul.f32 %v916, %v917
        %v919 = vadd.f32 %v918, %v588
        %v920 = vpack.c.bf16 %v919, %v919
        %v921 = vld [vmem:[%s4] sm:$0xf]
        %v922 = vld [vmem:[%s4 + $0x4] sm:$0xf]
        %v923 = vld [vmem:[%s4 + $0x8] sm:$0xf]
        %v924 = vld [vmem:[%s4 + $0xc] sm:$0xf]
        %v925 = vld [vmem:[%s4 + $0x10] sm:$0xf]
        %v926 = vld [vmem:[%s4 + $0x14] sm:$0xf]
        %v927 = vld [vmem:[%s4 + $0x18] sm:$0xf]
        %v928 = vld [vmem:[%s4 + $0x1c] sm:$0xf]
        %v929 = vld [vmem:[%s4 + $0x20] sm:$0xf]
        %v930 = vld [vmem:[%s4 + $0x24] sm:$0xf]
        %v931 = vld [vmem:[%s4 + $0x28] sm:$0xf]
        %v932 = vld [vmem:[%s4 + $0x2c] sm:$0xf]
        %v933 = vld [vmem:[%s4 + $0x30] sm:$0xf]
        %v934 = vld [vmem:[%s4 + $0x34] sm:$0xf]
        %v935 = vld [vmem:[%s4 + $0x38] sm:$0xf]
        %v936 = vld [vmem:[%s4 + $0x3c] sm:$0xf]
        %v937 = vld [vmem:[%s5] sm:$0x1]
        %v938 = vld [vmem:[%s5 + $0x1] sm:$0x1]
        %v939 = vld [vmem:[%s5 + $0x2] sm:$0x1]
        %v940 = vld [vmem:[%s5 + $0x3] sm:$0x1]
        %v945 = vlaneseq
        %v946 = vshrl.u32 %v945, 7
        %v947 = vsub.s32 0, %v946
        %v948 = vrot.slane %v937, %v947
        %v949 = vlaneseq
        %v950 = vshrl.u32 %v949, 7
        %v951 = vsub.s32 0, %v950
        %v952 = vrot.slane %v938, %v951
        %v953 = vlaneseq
        %v954 = vshrl.u32 %v953, 7
        %v955 = vsub.s32 0, %v954
        %v956 = vrot.slane %v939, %v955
        %v957 = vlaneseq
        %v958 = vshrl.u32 %v957, 7
        %v959 = vsub.s32 0, %v958
        %v960 = vrot.slane %v940, %v959
        %v969 = vunpack.c.l.b16 %v921
        %v970 = vunpack.c.l.b16 %v922
        %v971 = vunpack.c.l.b16 %v923
        %v972 = vunpack.c.l.b16 %v924
        %v973 = vpack.c.b16 %v970, %v969
        %v974 = vpack.c.b16 %v972, %v971
        %v978 = vsel %vm549, %v920, 0
        %980 = vmatprep.subr.bf16.mxu0 0
        %981 = vmatpush1.bf16.msra.mxu0 %v973
        %982 = vmatprep.subr.bf16.mxu0 0
        %983 = vmatpush1.bf16.msra.mxu0 %v974
        %984 = vmatprep.subr.bf16.mxu0 0
        %985 = vmatpush1.bf16.msra.mxu0 0
        %986 = vmatprep.subr.bf16.mxu0 0
        %987 = vmatpush1.bf16.msra.mxu0 0
        %988 = vmatprep.subr.bf16.mxu0 0
        %989 = vmatpush1.bf16.msra.mxu0 0
        %990 = vmatprep.subr.bf16.mxu0 0
        %991 = vmatpush1.bf16.msra.mxu0 0
        %992 = vmatprep.subr.bf16.mxu0 0
        %993 = vmatpush1.bf16.msra.mxu0 0
        %994 = vmatprep.subr.bf16.mxu0 0
        %995 = vmatpush1.bf16.msra.mxu0 0
        %996 = vmatprep.subr.bf16.mxu0 0
        %997 = vmatpush1.bf16.msra.mxu0 0
        %998 = vmatprep.subr.bf16.mxu0 0
        %999 = vmatpush1.bf16.msra.mxu0 0
        %1000 = vmatprep.subr.bf16.mxu0 0
        %1001 = vmatpush1.bf16.msra.mxu0 0
        %1002 = vmatprep.subr.bf16.mxu0 0
        %1003 = vmatpush1.bf16.msra.mxu0 0
        %1004 = vmatprep.subr.bf16.mxu0 0
        %1005 = vmatpush1.bf16.msra.mxu0 0
        %1006 = vmatprep.subr.bf16.mxu0 0
        %1007 = vmatpush1.bf16.msra.mxu0 0
        %1008 = vmatprep.subr.bf16.mxu0 0
        %1009 = vmatpush1.bf16.msra.mxu0 0
        %1010 = vmatprep.subr.bf16.mxu0 0
        %1011 = vmatpush1.bf16.msra.mxu0 0
        %1012 = vmatprep.mubr.bf16.mxu0 0
        %1013 = vmatmul.mubr.bf16.gmra.mrb[0].mxu0 %v978
        %v1014 = vpop.f32.mrb[0].mxu0
        %v1015 = vadd.f32 %v948, %v1014
        %v1016 = vpop.f32.mrb[0].mxu0
        %v1017 = vpop.f32.mrb[0].mxu0
        %v1018 = vpop.f32.mrb[0].mxu0
        %1019 = vdwg.mxu0
        %v1024 = vunpack.c.l.b16 %v925
        %v1025 = vunpack.c.l.b16 %v926
        %v1026 = vunpack.c.l.b16 %v927
        %v1027 = vunpack.c.l.b16 %v928
        %v1028 = vpack.c.b16 %v1025, %v1024
        %v1029 = vpack.c.b16 %v1027, %v1026
        %1032 = vmatprep.subr.bf16.mxu0 0
        %1033 = vmatpush1.bf16.msra.mxu0 %v1028
        %1034 = vmatprep.subr.bf16.mxu0 0
        %1035 = vmatpush1.bf16.msra.mxu0 %v1029
        %1036 = vmatprep.subr.bf16.mxu0 0
        %1037 = vmatpush1.bf16.msra.mxu0 0
        %1038 = vmatprep.subr.bf16.mxu0 0
        %1039 = vmatpush1.bf16.msra.mxu0 0
        %1040 = vmatprep.subr.bf16.mxu0 0
        %1041 = vmatpush1.bf16.msra.mxu0 0
        %1042 = vmatprep.subr.bf16.mxu0 0
        %1043 = vmatpush1.bf16.msra.mxu0 0
        %1044 = vmatprep.subr.bf16.mxu0 0
        %1045 = vmatpush1.bf16.msra.mxu0 0
        %1046 = vmatprep.subr.bf16.mxu0 0
        %1047 = vmatpush1.bf16.msra.mxu0 0
        %1048 = vmatprep.subr.bf16.mxu0 0
        %1049 = vmatpush1.bf16.msra.mxu0 0
        %1050 = vmatprep.subr.bf16.mxu0 0
        %1051 = vmatpush1.bf16.msra.mxu0 0
        %1052 = vmatprep.subr.bf16.mxu0 0
        %1053 = vmatpush1.bf16.msra.mxu0 0
        %1054 = vmatprep.subr.bf16.mxu0 0
        %1055 = vmatpush1.bf16.msra.mxu0 0
        %1056 = vmatprep.subr.bf16.mxu0 0
        %1057 = vmatpush1.bf16.msra.mxu0 0
        %1058 = vmatprep.subr.bf16.mxu0 0
        %1059 = vmatpush1.bf16.msra.mxu0 0
        %1060 = vmatprep.subr.bf16.mxu0 0
        %1061 = vmatpush1.bf16.msra.mxu0 0
        %1062 = vmatprep.subr.bf16.mxu0 0
        %1063 = vmatpush1.bf16.msra.mxu0 0
        %1064 = vmatprep.mubr.bf16.mxu0 0
        %1065 = vmatmul.mubr.bf16.gmra.mrb[0].mxu0 %v978
        %v1066 = vpop.f32.mrb[0].mxu0
        %v1067 = vadd.f32 %v952, %v1066
        %v1068 = vpop.f32.mrb[0].mxu0
        %v1069 = vpop.f32.mrb[0].mxu0
        %v1070 = vpop.f32.mrb[0].mxu0
        %1071 = vdwg.mxu0
        %v1076 = vunpack.c.l.b16 %v929
        %v1077 = vunpack.c.l.b16 %v930
        %v1078 = vunpack.c.l.b16 %v931
        %v1079 = vunpack.c.l.b16 %v932
        %v1080 = vpack.c.b16 %v1077, %v1076
        %v1081 = vpack.c.b16 %v1079, %v1078
        %1084 = vmatprep.subr.bf16.mxu0 0
        %1085 = vmatpush1.bf16.msra.mxu0 %v1080
        %1086 = vmatprep.subr.bf16.mxu0 0
        %1087 = vmatpush1.bf16.msra.mxu0 %v1081
        %1088 = vmatprep.subr.bf16.mxu0 0
        %1089 = vmatpush1.bf16.msra.mxu0 0
        %1090 = vmatprep.subr.bf16.mxu0 0
        %1091 = vmatpush1.bf16.msra.mxu0 0
        %1092 = vmatprep.subr.bf16.mxu0 0
        %1093 = vmatpush1.bf16.msra.mxu0 0
        %1094 = vmatprep.subr.bf16.mxu0 0
        %1095 = vmatpush1.bf16.msra.mxu0 0
        %1096 = vmatprep.subr.bf16.mxu0 0
        %1097 = vmatpush1.bf16.msra.mxu0 0
        %1098 = vmatprep.subr.bf16.mxu0 0
        %1099 = vmatpush1.bf16.msra.mxu0 0
        %1100 = vmatprep.subr.bf16.mxu0 0
        %1101 = vmatpush1.bf16.msra.mxu0 0
        %1102 = vmatprep.subr.bf16.mxu0 0
        %1103 = vmatpush1.bf16.msra.mxu0 0
        %1104 = vmatprep.subr.bf16.mxu0 0
        %1105 = vmatpush1.bf16.msra.mxu0 0
        %1106 = vmatprep.subr.bf16.mxu0 0
        %1107 = vmatpush1.bf16.msra.mxu0 0
        %1108 = vmatprep.subr.bf16.mxu0 0
        %1109 = vmatpush1.bf16.msra.mxu0 0
        %1110 = vmatprep.subr.bf16.mxu0 0
        %1111 = vmatpush1.bf16.msra.mxu0 0
        %1112 = vmatprep.subr.bf16.mxu0 0
        %1113 = vmatpush1.bf16.msra.mxu0 0
        %1114 = vmatprep.subr.bf16.mxu0 0
        %1115 = vmatpush1.bf16.msra.mxu0 0
        %1116 = vmatprep.mubr.bf16.mxu0 0
        %1117 = vmatmul.mubr.bf16.gmra.mrb[0].mxu0 %v978
        %v1118 = vpop.f32.mrb[0].mxu0
        %v1119 = vadd.f32 %v956, %v1118
        %v1120 = vpop.f32.mrb[0].mxu0
        %v1121 = vpop.f32.mrb[0].mxu0
        %v1122 = vpop.f32.mrb[0].mxu0
        %1123 = vdwg.mxu0
        %v1128 = vunpack.c.l.b16 %v933
        %v1129 = vunpack.c.l.b16 %v934
        %v1130 = vunpack.c.l.b16 %v935
        %v1131 = vunpack.c.l.b16 %v936
        %v1132 = vpack.c.b16 %v1129, %v1128
        %v1133 = vpack.c.b16 %v1131, %v1130
        %1136 = vmatprep.subr.bf16.mxu0 0
        %1137 = vmatpush1.bf16.msra.mxu0 %v1132
        %1138 = vmatprep.subr.bf16.mxu0 0
        %1139 = vmatpush1.bf16.msra.mxu0 %v1133
        %1140 = vmatprep.subr.bf16.mxu0 0
        %1141 = vmatpush1.bf16.msra.mxu0 0
        %1142 = vmatprep.subr.bf16.mxu0 0
        %1143 = vmatpush1.bf16.msra.mxu0 0
        %1144 = vmatprep.subr.bf16.mxu0 0
        %1145 = vmatpush1.bf16.msra.mxu0 0
        %1146 = vmatprep.subr.bf16.mxu0 0
        %1147 = vmatpush1.bf16.msra.mxu0 0
        %1148 = vmatprep.subr.bf16.mxu0 0
        %1149 = vmatpush1.bf16.msra.mxu0 0
        %1150 = vmatprep.subr.bf16.mxu0 0
        %1151 = vmatpush1.bf16.msra.mxu0 0
        %1152 = vmatprep.subr.bf16.mxu0 0
        %1153 = vmatpush1.bf16.msra.mxu0 0
        %1154 = vmatprep.subr.bf16.mxu0 0
        %1155 = vmatpush1.bf16.msra.mxu0 0
        %1156 = vmatprep.subr.bf16.mxu0 0
        %1157 = vmatpush1.bf16.msra.mxu0 0
        %1158 = vmatprep.subr.bf16.mxu0 0
        %1159 = vmatpush1.bf16.msra.mxu0 0
        %1160 = vmatprep.subr.bf16.mxu0 0
        %1161 = vmatpush1.bf16.msra.mxu0 0
        %1162 = vmatprep.subr.bf16.mxu0 0
        %1163 = vmatpush1.bf16.msra.mxu0 0
        %1164 = vmatprep.subr.bf16.mxu0 0
        %1165 = vmatpush1.bf16.msra.mxu0 0
        %1166 = vmatprep.subr.bf16.mxu0 0
        %1167 = vmatpush1.bf16.msra.mxu0 0
        %1168 = vmatprep.mubr.bf16.mxu0 0
        %1169 = vmatmul.mubr.bf16.gmra.mrb[0].mxu0 %v978
        %v1170 = vpop.f32.mrb[0].mxu0
        %v1171 = vadd.f32 %v960, %v1170
        %v1172 = vpop.f32.mrb[0].mxu0
        %v1173 = vpop.f32.mrb[0].mxu0
        %v1174 = vpop.f32.mrb[0].mxu0
        %1175 = vdwg.mxu0
        %v1176 = vld [vmem:[%s6] sm:$0xf]
        %v1177 = vld [vmem:[%s6 + $0x4] sm:$0xf]
        %v1178 = vld [vmem:[%s6 + $0x8] sm:$0xf]
        %v1179 = vld [vmem:[%s6 + $0xc] sm:$0xf]
        %v1180 = vld [vmem:[%s6 + $0x10] sm:$0xf]
        %v1181 = vld [vmem:[%s6 + $0x14] sm:$0xf]
        %v1182 = vld [vmem:[%s6 + $0x18] sm:$0xf]
        %v1183 = vld [vmem:[%s6 + $0x1c] sm:$0xf]
        %v1184 = vld [vmem:[%s6 + $0x20] sm:$0xf]
        %v1185 = vld [vmem:[%s6 + $0x24] sm:$0xf]
        %v1186 = vld [vmem:[%s6 + $0x28] sm:$0xf]
        %v1187 = vld [vmem:[%s6 + $0x2c] sm:$0xf]
        %v1188 = vld [vmem:[%s6 + $0x30] sm:$0xf]
        %v1189 = vld [vmem:[%s6 + $0x34] sm:$0xf]
        %v1190 = vld [vmem:[%s6 + $0x38] sm:$0xf]
        %v1191 = vld [vmem:[%s6 + $0x3c] sm:$0xf]
        %v1192 = vld [vmem:[%s7] sm:$0x1]
        %v1193 = vld [vmem:[%s7 + $0x1] sm:$0x1]
        %v1194 = vld [vmem:[%s7 + $0x2] sm:$0x1]
        %v1195 = vld [vmem:[%s7 + $0x3] sm:$0x1]
        %v1200 = vlaneseq
        %v1201 = vshrl.u32 %v1200, 7
        %v1202 = vsub.s32 0, %v1201
        %v1203 = vrot.slane %v1192, %v1202
        %v1204 = vlaneseq
        %v1205 = vshrl.u32 %v1204, 7
        %v1206 = vsub.s32 0, %v1205
        %v1207 = vrot.slane %v1193, %v1206
        %v1208 = vlaneseq
        %v1209 = vshrl.u32 %v1208, 7
        %v1210 = vsub.s32 0, %v1209
        %v1211 = vrot.slane %v1194, %v1210
        %v1212 = vlaneseq
        %v1213 = vshrl.u32 %v1212, 7
        %v1214 = vsub.s32 0, %v1213
        %v1215 = vrot.slane %v1195, %v1214
        %v1224 = vunpack.c.l.b16 %v1176
        %v1225 = vunpack.c.l.b16 %v1177
        %v1226 = vunpack.c.l.b16 %v1178
        %v1227 = vunpack.c.l.b16 %v1179
        %v1228 = vpack.c.b16 %v1225, %v1224
        %v1229 = vpack.c.b16 %v1227, %v1226
        %1232 = vmatprep.subr.bf16.mxu0 0
        %1233 = vmatpush1.bf16.msra.mxu0 %v1228
        %1234 = vmatprep.subr.bf16.mxu0 0
        %1235 = vmatpush1.bf16.msra.mxu0 %v1229
        %1236 = vmatprep.subr.bf16.mxu0 0
        %1237 = vmatpush1.bf16.msra.mxu0 0
        %1238 = vmatprep.subr.bf16.mxu0 0
        %1239 = vmatpush1.bf16.msra.mxu0 0
        %1240 = vmatprep.subr.bf16.mxu0 0
        %1241 = vmatpush1.bf16.msra.mxu0 0
        %1242 = vmatprep.subr.bf16.mxu0 0
        %1243 = vmatpush1.bf16.msra.mxu0 0
        %1244 = vmatprep.subr.bf16.mxu0 0
        %1245 = vmatpush1.bf16.msra.mxu0 0
        %1246 = vmatprep.subr.bf16.mxu0 0
        %1247 = vmatpush1.bf16.msra.mxu0 0
        %1248 = vmatprep.subr.bf16.mxu0 0
        %1249 = vmatpush1.bf16.msra.mxu0 0
        %1250 = vmatprep.subr.bf16.mxu0 0
        %1251 = vmatpush1.bf16.msra.mxu0 0
        %1252 = vmatprep.subr.bf16.mxu0 0
        %1253 = vmatpush1.bf16.msra.mxu0 0
        %1254 = vmatprep.subr.bf16.mxu0 0
        %1255 = vmatpush1.bf16.msra.mxu0 0
        %1256 = vmatprep.subr.bf16.mxu0 0
        %1257 = vmatpush1.bf16.msra.mxu0 0
        %1258 = vmatprep.subr.bf16.mxu0 0
        %1259 = vmatpush1.bf16.msra.mxu0 0
        %1260 = vmatprep.subr.bf16.mxu0 0
        %1261 = vmatpush1.bf16.msra.mxu0 0
        %1262 = vmatprep.subr.bf16.mxu0 0
        %1263 = vmatpush1.bf16.msra.mxu0 0
        %1264 = vmatprep.mubr.bf16.mxu0 0
        %1265 = vmatmul.mubr.bf16.gmra.mrb[0].mxu0 %v978
        %v1266 = vpop.f32.mrb[0].mxu0
        %v1267 = vadd.f32 %v1203, %v1266
        %v1268 = vpop.f32.mrb[0].mxu0
        %v1269 = vpop.f32.mrb[0].mxu0
        %v1270 = vpop.f32.mrb[0].mxu0
        %1271 = vdwg.mxu0
        %v1276 = vunpack.c.l.b16 %v1180
        %v1277 = vunpack.c.l.b16 %v1181
        %v1278 = vunpack.c.l.b16 %v1182
        %v1279 = vunpack.c.l.b16 %v1183
        %v1280 = vpack.c.b16 %v1277, %v1276
        %v1281 = vpack.c.b16 %v1279, %v1278
        %1284 = vmatprep.subr.bf16.mxu0 0
        %1285 = vmatpush1.bf16.msra.mxu0 %v1280
        %1286 = vmatprep.subr.bf16.mxu0 0
        %1287 = vmatpush1.bf16.msra.mxu0 %v1281
        %1288 = vmatprep.subr.bf16.mxu0 0
        %1289 = vmatpush1.bf16.msra.mxu0 0
        %1290 = vmatprep.subr.bf16.mxu0 0
        %1291 = vmatpush1.bf16.msra.mxu0 0
        %1292 = vmatprep.subr.bf16.mxu0 0
        %1293 = vmatpush1.bf16.msra.mxu0 0
        %1294 = vmatprep.subr.bf16.mxu0 0
        %1295 = vmatpush1.bf16.msra.mxu0 0
        %1296 = vmatprep.subr.bf16.mxu0 0
        %1297 = vmatpush1.bf16.msra.mxu0 0
        %1298 = vmatprep.subr.bf16.mxu0 0
        %1299 = vmatpush1.bf16.msra.mxu0 0
        %1300 = vmatprep.subr.bf16.mxu0 0
        %1301 = vmatpush1.bf16.msra.mxu0 0
        %1302 = vmatprep.subr.bf16.mxu0 0
        %1303 = vmatpush1.bf16.msra.mxu0 0
        %1304 = vmatprep.subr.bf16.mxu0 0
        %1305 = vmatpush1.bf16.msra.mxu0 0
        %1306 = vmatprep.subr.bf16.mxu0 0
        %1307 = vmatpush1.bf16.msra.mxu0 0
        %1308 = vmatprep.subr.bf16.mxu0 0
        %1309 = vmatpush1.bf16.msra.mxu0 0
        %1310 = vmatprep.subr.bf16.mxu0 0
        %1311 = vmatpush1.bf16.msra.mxu0 0
        %1312 = vmatprep.subr.bf16.mxu0 0
        %1313 = vmatpush1.bf16.msra.mxu0 0
        %1314 = vmatprep.subr.bf16.mxu0 0
        %1315 = vmatpush1.bf16.msra.mxu0 0
        %1316 = vmatprep.mubr.bf16.mxu0 0
        %1317 = vmatmul.mubr.bf16.gmra.mrb[0].mxu0 %v978
        %v1318 = vpop.f32.mrb[0].mxu0
        %v1319 = vadd.f32 %v1207, %v1318
        %v1320 = vpop.f32.mrb[0].mxu0
        %v1321 = vpop.f32.mrb[0].mxu0
        %v1322 = vpop.f32.mrb[0].mxu0
        %1323 = vdwg.mxu0
        %v1328 = vunpack.c.l.b16 %v1184
        %v1329 = vunpack.c.l.b16 %v1185
        %v1330 = vunpack.c.l.b16 %v1186
        %v1331 = vunpack.c.l.b16 %v1187
        %v1332 = vpack.c.b16 %v1329, %v1328
        %v1333 = vpack.c.b16 %v1331, %v1330
        %1336 = vmatprep.subr.bf16.mxu0 0
        %1337 = vmatpush1.bf16.msra.mxu0 %v1332
        %1338 = vmatprep.subr.bf16.mxu0 0
        %1339 = vmatpush1.bf16.msra.mxu0 %v1333
        %1340 = vmatprep.subr.bf16.mxu0 0
        %1341 = vmatpush1.bf16.msra.mxu0 0
        %1342 = vmatprep.subr.bf16.mxu0 0
        %1343 = vmatpush1.bf16.msra.mxu0 0
        %1344 = vmatprep.subr.bf16.mxu0 0
        %1345 = vmatpush1.bf16.msra.mxu0 0
        %1346 = vmatprep.subr.bf16.mxu0 0
        %1347 = vmatpush1.bf16.msra.mxu0 0
        %1348 = vmatprep.subr.bf16.mxu0 0
        %1349 = vmatpush1.bf16.msra.mxu0 0
        %1350 = vmatprep.subr.bf16.mxu0 0
        %1351 = vmatpush1.bf16.msra.mxu0 0
        %1352 = vmatprep.subr.bf16.mxu0 0
        %1353 = vmatpush1.bf16.msra.mxu0 0
        %1354 = vmatprep.subr.bf16.mxu0 0
        %1355 = vmatpush1.bf16.msra.mxu0 0
        %1356 = vmatprep.subr.bf16.mxu0 0
        %1357 = vmatpush1.bf16.msra.mxu0 0
        %1358 = vmatprep.subr.bf16.mxu0 0
        %1359 = vmatpush1.bf16.msra.mxu0 0
        %1360 = vmatprep.subr.bf16.mxu0 0
        %1361 = vmatpush1.bf16.msra.mxu0 0
        %1362 = vmatprep.subr.bf16.mxu0 0
        %1363 = vmatpush1.bf16.msra.mxu0 0
        %1364 = vmatprep.subr.bf16.mxu0 0
        %1365 = vmatpush1.bf16.msra.mxu0 0
        %1366 = vmatprep.subr.bf16.mxu0 0
        %1367 = vmatpush1.bf16.msra.mxu0 0
        %1368 = vmatprep.mubr.bf16.mxu0 0
        %1369 = vmatmul.mubr.bf16.gmra.mrb[0].mxu0 %v978
        %v1370 = vpop.f32.mrb[0].mxu0
        %v1371 = vadd.f32 %v1211, %v1370
        %v1372 = vpop.f32.mrb[0].mxu0
        %v1373 = vpop.f32.mrb[0].mxu0
        %v1374 = vpop.f32.mrb[0].mxu0
        %1375 = vdwg.mxu0
        %v1380 = vunpack.c.l.b16 %v1188
        %v1381 = vunpack.c.l.b16 %v1189
        %v1382 = vunpack.c.l.b16 %v1190
        %v1383 = vunpack.c.l.b16 %v1191
        %v1384 = vpack.c.b16 %v1381, %v1380
        %v1385 = vpack.c.b16 %v1383, %v1382
        %1388 = vmatprep.subr.bf16.mxu0 0
        %1389 = vmatpush1.bf16.msra.mxu0 %v1384
        %1390 = vmatprep.subr.bf16.mxu0 0
        %1391 = vmatpush1.bf16.msra.mxu0 %v1385
        %1392 = vmatprep.subr.bf16.mxu0 0
        %1393 = vmatpush1.bf16.msra.mxu0 0
        %1394 = vmatprep.subr.bf16.mxu0 0
        %1395 = vmatpush1.bf16.msra.mxu0 0
        %1396 = vmatprep.subr.bf16.mxu0 0
        %1397 = vmatpush1.bf16.msra.mxu0 0
        %1398 = vmatprep.subr.bf16.mxu0 0
        %1399 = vmatpush1.bf16.msra.mxu0 0
        %1400 = vmatprep.subr.bf16.mxu0 0
        %1401 = vmatpush1.bf16.msra.mxu0 0
        %1402 = vmatprep.subr.bf16.mxu0 0
        %1403 = vmatpush1.bf16.msra.mxu0 0
        %1404 = vmatprep.subr.bf16.mxu0 0
        %1405 = vmatpush1.bf16.msra.mxu0 0
        %1406 = vmatprep.subr.bf16.mxu0 0
        %1407 = vmatpush1.bf16.msra.mxu0 0
        %1408 = vmatprep.subr.bf16.mxu0 0
        %1409 = vmatpush1.bf16.msra.mxu0 0
        %1410 = vmatprep.subr.bf16.mxu0 0
        %1411 = vmatpush1.bf16.msra.mxu0 0
        %1412 = vmatprep.subr.bf16.mxu0 0
        %1413 = vmatpush1.bf16.msra.mxu0 0
        %1414 = vmatprep.subr.bf16.mxu0 0
        %1415 = vmatpush1.bf16.msra.mxu0 0
        %1416 = vmatprep.subr.bf16.mxu0 0
        %1417 = vmatpush1.bf16.msra.mxu0 0
        %1418 = vmatprep.subr.bf16.mxu0 0
        %1419 = vmatpush1.bf16.msra.mxu0 0
        %1420 = vmatprep.mubr.bf16.mxu0 0
        %1421 = vmatmul.mubr.bf16.gmra.mrb[0].mxu0 %v978
        %v1422 = vpop.f32.mrb[0].mxu0
        %v1423 = vadd.f32 %v1215, %v1422
        %v1424 = vpop.f32.mrb[0].mxu0
        %v1425 = vpop.f32.mrb[0].mxu0
        %v1426 = vpop.f32.mrb[0].mxu0
        %1427 = vdwg.mxu0
        %v1428 = vld [vmem:[%s8] sm:$0xf]
        %v1429 = vld [vmem:[%s8 + $0x4] sm:$0xf]
        %v1430 = vld [vmem:[%s8 + $0x8] sm:$0xf]
        %v1431 = vld [vmem:[%s8 + $0xc] sm:$0xf]
        %v1432 = vld [vmem:[%s8 + $0x10] sm:$0xf]
        %v1433 = vld [vmem:[%s8 + $0x14] sm:$0xf]
        %v1434 = vld [vmem:[%s8 + $0x18] sm:$0xf]
        %v1435 = vld [vmem:[%s8 + $0x1c] sm:$0xf]
        %v1436 = vld [vmem:[%s8 + $0x20] sm:$0xf]
        %v1437 = vld [vmem:[%s8 + $0x24] sm:$0xf]
        %v1438 = vld [vmem:[%s8 + $0x28] sm:$0xf]
        %v1439 = vld [vmem:[%s8 + $0x2c] sm:$0xf]
        %v1440 = vld [vmem:[%s8 + $0x30] sm:$0xf]
        %v1441 = vld [vmem:[%s8 + $0x34] sm:$0xf]
        %v1442 = vld [vmem:[%s8 + $0x38] sm:$0xf]
        %v1443 = vld [vmem:[%s8 + $0x3c] sm:$0xf]
        %v1444 = vld [vmem:[%s9] sm:$0x1]
        %v1445 = vld [vmem:[%s9 + $0x1] sm:$0x1]
        %v1446 = vld [vmem:[%s9 + $0x2] sm:$0x1]
        %v1447 = vld [vmem:[%s9 + $0x3] sm:$0x1]
        %v1452 = vlaneseq
        %v1453 = vshrl.u32 %v1452, 7
        %v1454 = vsub.s32 0, %v1453
        %v1455 = vrot.slane %v1444, %v1454
        %v1456 = vlaneseq
        %v1457 = vshrl.u32 %v1456, 7
        %v1458 = vsub.s32 0, %v1457
        %v1459 = vrot.slane %v1445, %v1458
        %v1460 = vlaneseq
        %v1461 = vshrl.u32 %v1460, 7
        %v1462 = vsub.s32 0, %v1461
        %v1463 = vrot.slane %v1446, %v1462
        %v1464 = vlaneseq
        %v1465 = vshrl.u32 %v1464, 7
        %v1466 = vsub.s32 0, %v1465
        %v1467 = vrot.slane %v1447, %v1466
        %v1476 = vunpack.c.l.b16 %v1428
        %v1477 = vunpack.c.l.b16 %v1429
        %v1478 = vunpack.c.l.b16 %v1430
        %v1479 = vunpack.c.l.b16 %v1431
        %v1480 = vpack.c.b16 %v1477, %v1476
        %v1481 = vpack.c.b16 %v1479, %v1478
        %1484 = vmatprep.subr.bf16.mxu0 0
        %1485 = vmatpush1.bf16.msra.mxu0 %v1480
        %1486 = vmatprep.subr.bf16.mxu0 0
        %1487 = vmatpush1.bf16.msra.mxu0 %v1481
        %1488 = vmatprep.subr.bf16.mxu0 0
        %1489 = vmatpush1.bf16.msra.mxu0 0
        %1490 = vmatprep.subr.bf16.mxu0 0
        %1491 = vmatpush1.bf16.msra.mxu0 0
        %1492 = vmatprep.subr.bf16.mxu0 0
        %1493 = vmatpush1.bf16.msra.mxu0 0
        %1494 = vmatprep.subr.bf16.mxu0 0
        %1495 = vmatpush1.bf16.msra.mxu0 0
        %1496 = vmatprep.subr.bf16.mxu0 0
        %1497 = vmatpush1.bf16.msra.mxu0 0
        %1498 = vmatprep.subr.bf16.mxu0 0
        %1499 = vmatpush1.bf16.msra.mxu0 0
        %1500 = vmatprep.subr.bf16.mxu0 0
        %1501 = vmatpush1.bf16.msra.mxu0 0
        %1502 = vmatprep.subr.bf16.mxu0 0
        %1503 = vmatpush1.bf16.msra.mxu0 0
        %1504 = vmatprep.subr.bf16.mxu0 0
        %1505 = vmatpush1.bf16.msra.mxu0 0
        %1506 = vmatprep.subr.bf16.mxu0 0
        %1507 = vmatpush1.bf16.msra.mxu0 0
        %1508 = vmatprep.subr.bf16.mxu0 0
        %1509 = vmatpush1.bf16.msra.mxu0 0
        %1510 = vmatprep.subr.bf16.mxu0 0
        %1511 = vmatpush1.bf16.msra.mxu0 0
        %1512 = vmatprep.subr.bf16.mxu0 0
        %1513 = vmatpush1.bf16.msra.mxu0 0
        %1514 = vmatprep.subr.bf16.mxu0 0
        %1515 = vmatpush1.bf16.msra.mxu0 0
        %1516 = vmatprep.mubr.bf16.mxu0 0
        %1517 = vmatmul.mubr.bf16.gmra.mrb[0].mxu0 %v978
        %v1518 = vpop.f32.mrb[0].mxu0
        %v1519 = vadd.f32 %v1455, %v1518
        %v1520 = vpop.f32.mrb[0].mxu0
        %v1521 = vpop.f32.mrb[0].mxu0
        %v1522 = vpop.f32.mrb[0].mxu0
        %1523 = vdwg.mxu0
        %v1528 = vunpack.c.l.b16 %v1432
        %v1529 = vunpack.c.l.b16 %v1433
        %v1530 = vunpack.c.l.b16 %v1434
        %v1531 = vunpack.c.l.b16 %v1435
        %v1532 = vpack.c.b16 %v1529, %v1528
        %v1533 = vpack.c.b16 %v1531, %v1530
        %1536 = vmatprep.subr.bf16.mxu0 0
        %1537 = vmatpush1.bf16.msra.mxu0 %v1532
        %1538 = vmatprep.subr.bf16.mxu0 0
        %1539 = vmatpush1.bf16.msra.mxu0 %v1533
        %1540 = vmatprep.subr.bf16.mxu0 0
        %1541 = vmatpush1.bf16.msra.mxu0 0
        %1542 = vmatprep.subr.bf16.mxu0 0
        %1543 = vmatpush1.bf16.msra.mxu0 0
        %1544 = vmatprep.subr.bf16.mxu0 0
        %1545 = vmatpush1.bf16.msra.mxu0 0
        %1546 = vmatprep.subr.bf16.mxu0 0
        %1547 = vmatpush1.bf16.msra.mxu0 0
        %1548 = vmatprep.subr.bf16.mxu0 0
        %1549 = vmatpush1.bf16.msra.mxu0 0
        %1550 = vmatprep.subr.bf16.mxu0 0
        %1551 = vmatpush1.bf16.msra.mxu0 0
        %1552 = vmatprep.subr.bf16.mxu0 0
        %1553 = vmatpush1.bf16.msra.mxu0 0
        %1554 = vmatprep.subr.bf16.mxu0 0
        %1555 = vmatpush1.bf16.msra.mxu0 0
        %1556 = vmatprep.subr.bf16.mxu0 0
        %1557 = vmatpush1.bf16.msra.mxu0 0
        %1558 = vmatprep.subr.bf16.mxu0 0
        %1559 = vmatpush1.bf16.msra.mxu0 0
        %1560 = vmatprep.subr.bf16.mxu0 0
        %1561 = vmatpush1.bf16.msra.mxu0 0
        %1562 = vmatprep.subr.bf16.mxu0 0
        %1563 = vmatpush1.bf16.msra.mxu0 0
        %1564 = vmatprep.subr.bf16.mxu0 0
        %1565 = vmatpush1.bf16.msra.mxu0 0
        %1566 = vmatprep.subr.bf16.mxu0 0
        %1567 = vmatpush1.bf16.msra.mxu0 0
        %1568 = vmatprep.mubr.bf16.mxu0 0
        %1569 = vmatmul.mubr.bf16.gmra.mrb[0].mxu0 %v978
        %v1570 = vpop.f32.mrb[0].mxu0
        %v1571 = vadd.f32 %v1459, %v1570
        %v1572 = vpop.f32.mrb[0].mxu0
        %v1573 = vpop.f32.mrb[0].mxu0
        %v1574 = vpop.f32.mrb[0].mxu0
        %1575 = vdwg.mxu0
        %v1580 = vunpack.c.l.b16 %v1436
        %v1581 = vunpack.c.l.b16 %v1437
        %v1582 = vunpack.c.l.b16 %v1438
        %v1583 = vunpack.c.l.b16 %v1439
        %v1584 = vpack.c.b16 %v1581, %v1580
        %v1585 = vpack.c.b16 %v1583, %v1582
        %1588 = vmatprep.subr.bf16.mxu0 0
        %1589 = vmatpush1.bf16.msra.mxu0 %v1584
        %1590 = vmatprep.subr.bf16.mxu0 0
        %1591 = vmatpush1.bf16.msra.mxu0 %v1585
        %1592 = vmatprep.subr.bf16.mxu0 0
        %1593 = vmatpush1.bf16.msra.mxu0 0
        %1594 = vmatprep.subr.bf16.mxu0 0
        %1595 = vmatpush1.bf16.msra.mxu0 0
        %1596 = vmatprep.subr.bf16.mxu0 0
        %1597 = vmatpush1.bf16.msra.mxu0 0
        %1598 = vmatprep.subr.bf16.mxu0 0
        %1599 = vmatpush1.bf16.msra.mxu0 0
        %1600 = vmatprep.subr.bf16.mxu0 0
        %1601 = vmatpush1.bf16.msra.mxu0 0
        %1602 = vmatprep.subr.bf16.mxu0 0
        %1603 = vmatpush1.bf16.msra.mxu0 0
        %1604 = vmatprep.subr.bf16.mxu0 0
        %1605 = vmatpush1.bf16.msra.mxu0 0
        %1606 = vmatprep.subr.bf16.mxu0 0
        %1607 = vmatpush1.bf16.msra.mxu0 0
        %1608 = vmatprep.subr.bf16.mxu0 0
        %1609 = vmatpush1.bf16.msra.mxu0 0
        %1610 = vmatprep.subr.bf16.mxu0 0
        %1611 = vmatpush1.bf16.msra.mxu0 0
        %1612 = vmatprep.subr.bf16.mxu0 0
        %1613 = vmatpush1.bf16.msra.mxu0 0
        %1614 = vmatprep.subr.bf16.mxu0 0
        %1615 = vmatpush1.bf16.msra.mxu0 0
        %1616 = vmatprep.subr.bf16.mxu0 0
        %1617 = vmatpush1.bf16.msra.mxu0 0
        %1618 = vmatprep.subr.bf16.mxu0 0
        %1619 = vmatpush1.bf16.msra.mxu0 0
        %1620 = vmatprep.mubr.bf16.mxu0 0
        %1621 = vmatmul.mubr.bf16.gmra.mrb[0].mxu0 %v978
        %v1622 = vpop.f32.mrb[0].mxu0
        %v1623 = vadd.f32 %v1463, %v1622
        %v1624 = vpop.f32.mrb[0].mxu0
        %v1625 = vpop.f32.mrb[0].mxu0
        %v1626 = vpop.f32.mrb[0].mxu0
        %1627 = vdwg.mxu0
        %v1632 = vunpack.c.l.b16 %v1440
        %v1633 = vunpack.c.l.b16 %v1441
        %v1634 = vunpack.c.l.b16 %v1442
        %v1635 = vunpack.c.l.b16 %v1443
        %v1636 = vpack.c.b16 %v1633, %v1632
        %v1637 = vpack.c.b16 %v1635, %v1634
        %1640 = vmatprep.subr.bf16.mxu0 0
        %1641 = vmatpush1.bf16.msra.mxu0 %v1636
        %1642 = vmatprep.subr.bf16.mxu0 0
        %1643 = vmatpush1.bf16.msra.mxu0 %v1637
        %1644 = vmatprep.subr.bf16.mxu0 0
        %1645 = vmatpush1.bf16.msra.mxu0 0
        %1646 = vmatprep.subr.bf16.mxu0 0
        %1647 = vmatpush1.bf16.msra.mxu0 0
        %1648 = vmatprep.subr.bf16.mxu0 0
        %1649 = vmatpush1.bf16.msra.mxu0 0
        %1650 = vmatprep.subr.bf16.mxu0 0
        %1651 = vmatpush1.bf16.msra.mxu0 0
        %1652 = vmatprep.subr.bf16.mxu0 0
        %1653 = vmatpush1.bf16.msra.mxu0 0
        %1654 = vmatprep.subr.bf16.mxu0 0
        %1655 = vmatpush1.bf16.msra.mxu0 0
        %1656 = vmatprep.subr.bf16.mxu0 0
        %1657 = vmatpush1.bf16.msra.mxu0 0
        %1658 = vmatprep.subr.bf16.mxu0 0
        %1659 = vmatpush1.bf16.msra.mxu0 0
        %1660 = vmatprep.subr.bf16.mxu0 0
        %1661 = vmatpush1.bf16.msra.mxu0 0
        %1662 = vmatprep.subr.bf16.mxu0 0
        %1663 = vmatpush1.bf16.msra.mxu0 0
        %1664 = vmatprep.subr.bf16.mxu0 0
        %1665 = vmatpush1.bf16.msra.mxu0 0
        %1666 = vmatprep.subr.bf16.mxu0 0
        %1667 = vmatpush1.bf16.msra.mxu0 0
        %1668 = vmatprep.subr.bf16.mxu0 0
        %1669 = vmatpush1.bf16.msra.mxu0 0
        %1670 = vmatprep.subr.bf16.mxu0 0
        %1671 = vmatpush1.bf16.msra.mxu0 0
        %1672 = vmatprep.mubr.bf16.mxu0 0
        %1673 = vmatmul.mubr.bf16.gmra.mrb[0].mxu0 %v978
        %v1674 = vpop.f32.mrb[0].mxu0
        %v1675 = vadd.f32 %v1467, %v1674
        %v1676 = vpop.f32.mrb[0].mxu0
        %v1677 = vpop.f32.mrb[0].mxu0
        %v1678 = vpop.f32.mrb[0].mxu0
        %1679 = vdwg.mxu0
        %v1680 = vpack.c.bf16 %v1015, %v1015
        %v1681 = vpack.c.bf16 %v1067, %v1067
        %v1682 = vpack.c.bf16 %v1119, %v1119
        %v1683 = vpack.c.bf16 %v1171, %v1171
        %v1684 = vpack.c.bf16 %v1267, %v1267
        %v1685 = vpack.c.bf16 %v1319, %v1319
        %v1686 = vpack.c.bf16 %v1371, %v1371
        %v1687 = vpack.c.bf16 %v1423, %v1423
        %vm1688 = vcmask 64512
        %v1690 = vsel %vm1688, %v1680, 0
        %v1693 = vsel %vm1688, %v1684, 0
        %1695 = vmatprep.subr.bf16.mxu0 0
        %1696 = vmatpush1.bf16.xpose.msra.mxu0 %v1693
        %1697 = vmatprep.subr.bf16.mxu0 0
        %1698 = vmatpush1.bf16.xpose.msra.mxu0 0
        %1699 = vmatprep.subr.bf16.mxu0 0
        %1700 = vmatpush1.bf16.xpose.msra.mxu0 0
        %1701 = vmatprep.subr.bf16.mxu0 0
        %1702 = vmatpush1.bf16.xpose.msra.mxu0 0
        %1703 = vmatprep.subr.bf16.mxu0 0
        %1704 = vmatpush1.bf16.xpose.msra.mxu0 0
        %1705 = vmatprep.subr.bf16.mxu0 0
        %1706 = vmatpush1.bf16.xpose.msra.mxu0 0
        %1707 = vmatprep.subr.bf16.mxu0 0
        %1708 = vmatpush1.bf16.xpose.msra.mxu0 0
        %1709 = vmatprep.subr.bf16.mxu0 0
        %1710 = vmatpush1.bf16.xpose.msra.mxu0 0
        %1711 = vmatprep.subr.bf16.mxu0 0
        %1712 = vmatpush1.bf16.xpose.msra.mxu0 0
        %1713 = vmatprep.subr.bf16.mxu0 0
        %1714 = vmatpush1.bf16.xpose.msra.mxu0 0
        %1715 = vmatprep.subr.bf16.mxu0 0
        %1716 = vmatpush1.bf16.xpose.msra.mxu0 0
        %1717 = vmatprep.subr.bf16.mxu0 0
        %1718 = vmatpush1.bf16.xpose.msra.mxu0 0
        %1719 = vmatprep.subr.bf16.mxu0 0
        %1720 = vmatpush1.bf16.xpose.msra.mxu0 0
        %1721 = vmatprep.subr.bf16.mxu0 0
        %1722 = vmatpush1.bf16.xpose.msra.mxu0 0
        %1723 = vmatprep.subr.bf16.mxu0 0
        %1724 = vmatpush1.bf16.xpose.msra.mxu0 0
        %1725 = vmatprep.subr.bf16.mxu0 0
        %1726 = vmatpush1.bf16.xpose.msra.mxu0 0
        %1727 = vmatprep.mubr.bf16.mxu0 0
        %1728 = vmatmul.mubr.bf16.gmra.mrb[0].mxu0 %v1690
        %v1729 = vpop.f32.mrb[0].mxu0
        %v1730 = vadd.f32 0.0, %v1729
        %v1731 = vpop.f32.mrb[0].mxu0
        %v1732 = vpop.f32.mrb[0].mxu0
        %v1733 = vpop.f32.mrb[0].mxu0
        %1734 = vdwg.mxu0
        %v1736 = vsel %vm1688, %v1681, 0
        %v1739 = vsel %vm1688, %v1685, 0
        %1741 = vmatprep.subr.bf16.mxu0 0
        %1742 = vmatpush1.bf16.xpose.msra.mxu0 %v1739
        %1743 = vmatprep.subr.bf16.mxu0 0
        %1744 = vmatpush1.bf16.xpose.msra.mxu0 0
        %1745 = vmatprep.subr.bf16.mxu0 0
        %1746 = vmatpush1.bf16.xpose.msra.mxu0 0
        %1747 = vmatprep.subr.bf16.mxu0 0
        %1748 = vmatpush1.bf16.xpose.msra.mxu0 0
        %1749 = vmatprep.subr.bf16.mxu0 0
        %1750 = vmatpush1.bf16.xpose.msra.mxu0 0
        %1751 = vmatprep.subr.bf16.mxu0 0
        %1752 = vmatpush1.bf16.xpose.msra.mxu0 0
        %1753 = vmatprep.subr.bf16.mxu0 0
        %1754 = vmatpush1.bf16.xpose.msra.mxu0 0
        %1755 = vmatprep.subr.bf16.mxu0 0
        %1756 = vmatpush1.bf16.xpose.msra.mxu0 0
        %1757 = vmatprep.subr.bf16.mxu0 0
        %1758 = vmatpush1.bf16.xpose.msra.mxu0 0
        %1759 = vmatprep.subr.bf16.mxu0 0
        %1760 = vmatpush1.bf16.xpose.msra.mxu0 0
        %1761 = vmatprep.subr.bf16.mxu0 0
        %1762 = vmatpush1.bf16.xpose.msra.mxu0 0
        %1763 = vmatprep.subr.bf16.mxu0 0
        %1764 = vmatpush1.bf16.xpose.msra.mxu0 0
        %1765 = vmatprep.subr.bf16.mxu0 0
        %1766 = vmatpush1.bf16.xpose.msra.mxu0 0
        %1767 = vmatprep.subr.bf16.mxu0 0
        %1768 = vmatpush1.bf16.xpose.msra.mxu0 0
        %1769 = vmatprep.subr.bf16.mxu0 0
        %1770 = vmatpush1.bf16.xpose.msra.mxu0 0
        %1771 = vmatprep.subr.bf16.mxu0 0
        %1772 = vmatpush1.bf16.xpose.msra.mxu0 0
        %1773 = vmatprep.mubr.bf16.mxu0 0
        %1774 = vmatmul.mubr.bf16.gmra.mrb[0].mxu0 %v1736
        %v1775 = vpop.f32.mrb[0].mxu0
        %v1776 = vadd.f32 0.0, %v1775
        %v1777 = vpop.f32.mrb[0].mxu0
        %v1778 = vpop.f32.mrb[0].mxu0
        %v1779 = vpop.f32.mrb[0].mxu0
        %1780 = vdwg.mxu0
        %v1782 = vsel %vm1688, %v1682, 0
        %v1785 = vsel %vm1688, %v1686, 0
        %1787 = vmatprep.subr.bf16.mxu0 0
        %1788 = vmatpush1.bf16.xpose.msra.mxu0 %v1785
        %1789 = vmatprep.subr.bf16.mxu0 0
        %1790 = vmatpush1.bf16.xpose.msra.mxu0 0
        %1791 = vmatprep.subr.bf16.mxu0 0
        %1792 = vmatpush1.bf16.xpose.msra.mxu0 0
        %1793 = vmatprep.subr.bf16.mxu0 0
        %1794 = vmatpush1.bf16.xpose.msra.mxu0 0
        %1795 = vmatprep.subr.bf16.mxu0 0
        %1796 = vmatpush1.bf16.xpose.msra.mxu0 0
        %1797 = vmatprep.subr.bf16.mxu0 0
        %1798 = vmatpush1.bf16.xpose.msra.mxu0 0
        %1799 = vmatprep.subr.bf16.mxu0 0
        %1800 = vmatpush1.bf16.xpose.msra.mxu0 0
        %1801 = vmatprep.subr.bf16.mxu0 0
        %1802 = vmatpush1.bf16.xpose.msra.mxu0 0
        %1803 = vmatprep.subr.bf16.mxu0 0
        %1804 = vmatpush1.bf16.xpose.msra.mxu0 0
        %1805 = vmatprep.subr.bf16.mxu0 0
        %1806 = vmatpush1.bf16.xpose.msra.mxu0 0
        %1807 = vmatprep.subr.bf16.mxu0 0
        %1808 = vmatpush1.bf16.xpose.msra.mxu0 0
        %1809 = vmatprep.subr.bf16.mxu0 0
        %1810 = vmatpush1.bf16.xpose.msra.mxu0 0
        %1811 = vmatprep.subr.bf16.mxu0 0
        %1812 = vmatpush1.bf16.xpose.msra.mxu0 0
        %1813 = vmatprep.subr.bf16.mxu0 0
        %1814 = vmatpush1.bf16.xpose.msra.mxu0 0
        %1815 = vmatprep.subr.bf16.mxu0 0
        %1816 = vmatpush1.bf16.xpose.msra.mxu0 0
        %1817 = vmatprep.subr.bf16.mxu0 0
        %1818 = vmatpush1.bf16.xpose.msra.mxu0 0
        %1819 = vmatprep.mubr.bf16.mxu0 0
        %1820 = vmatmul.mubr.bf16.gmra.mrb[0].mxu0 %v1782
        %v1821 = vpop.f32.mrb[0].mxu0
        %v1822 = vadd.f32 0.0, %v1821
        %v1823 = vpop.f32.mrb[0].mxu0
        %v1824 = vpop.f32.mrb[0].mxu0
        %v1825 = vpop.f32.mrb[0].mxu0
        %1826 = vdwg.mxu0
        %v1828 = vsel %vm1688, %v1683, 0
        %v1831 = vsel %vm1688, %v1687, 0
        %1833 = vmatprep.subr.bf16.mxu0 0
        %1834 = vmatpush1.bf16.xpose.msra.mxu0 %v1831
        %1835 = vmatprep.subr.bf16.mxu0 0
        %1836 = vmatpush1.bf16.xpose.msra.mxu0 0
        %1837 = vmatprep.subr.bf16.mxu0 0
        %1838 = vmatpush1.bf16.xpose.msra.mxu0 0
        %1839 = vmatprep.subr.bf16.mxu0 0
        %1840 = vmatpush1.bf16.xpose.msra.mxu0 0
        %1841 = vmatprep.subr.bf16.mxu0 0
        %1842 = vmatpush1.bf16.xpose.msra.mxu0 0
        %1843 = vmatprep.subr.bf16.mxu0 0
        %1844 = vmatpush1.bf16.xpose.msra.mxu0 0
        %1845 = vmatprep.subr.bf16.mxu0 0
        %1846 = vmatpush1.bf16.xpose.msra.mxu0 0
        %1847 = vmatprep.subr.bf16.mxu0 0
        %1848 = vmatpush1.bf16.xpose.msra.mxu0 0
        %1849 = vmatprep.subr.bf16.mxu0 0
        %1850 = vmatpush1.bf16.xpose.msra.mxu0 0
        %1851 = vmatprep.subr.bf16.mxu0 0
        %1852 = vmatpush1.bf16.xpose.msra.mxu0 0
        %1853 = vmatprep.subr.bf16.mxu0 0
        %1854 = vmatpush1.bf16.xpose.msra.mxu0 0
        %1855 = vmatprep.subr.bf16.mxu0 0
        %1856 = vmatpush1.bf16.xpose.msra.mxu0 0
        %1857 = vmatprep.subr.bf16.mxu0 0
        %1858 = vmatpush1.bf16.xpose.msra.mxu0 0
        %1859 = vmatprep.subr.bf16.mxu0 0
        %1860 = vmatpush1.bf16.xpose.msra.mxu0 0
        %1861 = vmatprep.subr.bf16.mxu0 0
        %1862 = vmatpush1.bf16.xpose.msra.mxu0 0
        %1863 = vmatprep.subr.bf16.mxu0 0
        %1864 = vmatpush1.bf16.xpose.msra.mxu0 0
        %1865 = vmatprep.mubr.bf16.mxu0 0
        %1866 = vmatmul.mubr.bf16.gmra.mrb[0].mxu0 %v1828
        %v1867 = vpop.f32.mrb[0].mxu0
        %v1868 = vadd.f32 0.0, %v1867
        %v1869 = vpop.f32.mrb[0].mxu0
        %v1870 = vpop.f32.mrb[0].mxu0
        %v1871 = vpop.f32.mrb[0].mxu0
        %1872 = vdwg.mxu0
        %v1873 = vsel %vm1688, %v1730, -inf
        %1874 = vmax.xlane.f32.xlu0 %v1873
        %v1875 = vpop.xlane.xlu0 %1874
        %v1876 = vsel %vm1688, %v1776, -inf
        %1877 = vmax.xlane.f32.xlu0 %v1876
        %v1878 = vpop.xlane.xlu0 %1877
        %v1879 = vsel %vm1688, %v1822, -inf
        %1880 = vmax.xlane.f32.xlu0 %v1879
        %v1881 = vpop.xlane.xlu0 %1880
        %v1882 = vsel %vm1688, %v1868, -inf
        %1883 = vmax.xlane.f32.xlu0 %v1882
        %v1884 = vpop.xlane.xlu0 %1883
        %v1885 = vsub.f32 %v1730, %v1875
        %v1886 = vsub.f32 %v1776, %v1878
        %v1887 = vsub.f32 %v1822, %v1881
        %v1888 = vsub.f32 %v1868, %v1884
        %v1889 = vmul.f32 %v1885, 1.442695
        %v1890 = vpow.pop %v1889
        %v1891 = vmul.f32 %v1886, 1.442695
        %v1892 = vpow.pop %v1891
        %v1893 = vmul.f32 %v1887, 1.442695
        %v1894 = vpow.pop %v1893
        %v1895 = vmul.f32 %v1888, 1.442695
        %v1896 = vpow.pop %v1895
        %v1897 = vsel %vm1688, %v1890, 0.0
        %1898 = vadd.xlane.f32.xlu0 %v1897
        %v1899 = vpop.xlane.xlu0 %1898
        %v1900 = vsel %vm1688, %v1892, 0.0
        %1901 = vadd.xlane.f32.xlu0 %v1900
        %v1902 = vpop.xlane.xlu0 %1901
        %v1903 = vsel %vm1688, %v1894, 0.0
        %1904 = vadd.xlane.f32.xlu0 %v1903
        %v1905 = vpop.xlane.xlu0 %1904
        %v1906 = vsel %vm1688, %v1896, 0.0
        %1907 = vadd.xlane.f32.xlu0 %v1906
        %v1908 = vpop.xlane.xlu0 %1907
        %v1909 = vrcp.pop %v1899
        %v1910 = vrcp.pop %v1902
        %v1911 = vrcp.pop %v1905
        %v1912 = vrcp.pop %v1908
        %v1913 = vmul.f32 %v1890, %v1909
        %v1914 = vmul.f32 %v1892, %v1910
        %v1915 = vmul.f32 %v1894, %v1911
        %v1916 = vmul.f32 %v1896, %v1912
        %v1917 = vpack.c.bf16 %v1913, %v1913
        %v1918 = vpack.c.bf16 %v1914, %v1914
        %v1919 = vpack.c.bf16 %v1915, %v1915
        %v1920 = vpack.c.bf16 %v1916, %v1916
        %v1921 = vpack.c.bf16 %v1519, %v1519
        %v1922 = vpack.c.bf16 %v1571, %v1571
        %v1923 = vpack.c.bf16 %v1623, %v1623
        %v1924 = vpack.c.bf16 %v1675, %v1675
        %v1926 = vsel %vm1688, %v1917, 0
        %vm1928 = vcmask 1043456
        %v1930 = vsel %vm1928, %v1921, 0
        %1932 = vmatprep.subr.bf16.mxu0 0
        %1933 = vmatpush1.bf16.msra.mxu0 %v1930
        %1934 = vmatprep.subr.bf16.mxu0 0
        %1935 = vmatpush1.bf16.msra.mxu0 0
        %1936 = vmatprep.subr.bf16.mxu0 0
        %1937 = vmatpush1.bf16.msra.mxu0 0
        %1938 = vmatprep.subr.bf16.mxu0 0
        %1939 = vmatpush1.bf16.msra.mxu0 0
        %1940 = vmatprep.subr.bf16.mxu0 0
        %1941 = vmatpush1.bf16.msra.mxu0 0
        %1942 = vmatprep.subr.bf16.mxu0 0
        %1943 = vmatpush1.bf16.msra.mxu0 0
        %1944 = vmatprep.subr.bf16.mxu0 0
        %1945 = vmatpush1.bf16.msra.mxu0 0
        %1946 = vmatprep.subr.bf16.mxu0 0
        %1947 = vmatpush1.bf16.msra.mxu0 0
        %1948 = vmatprep.subr.bf16.mxu0 0
        %1949 = vmatpush1.bf16.msra.mxu0 0
        %1950 = vmatprep.subr.bf16.mxu0 0
        %1951 = vmatpush1.bf16.msra.mxu0 0
        %1952 = vmatprep.subr.bf16.mxu0 0
        %1953 = vmatpush1.bf16.msra.mxu0 0
        %1954 = vmatprep.subr.bf16.mxu0 0
        %1955 = vmatpush1.bf16.msra.mxu0 0
        %1956 = vmatprep.subr.bf16.mxu0 0
        %1957 = vmatpush1.bf16.msra.mxu0 0
        %1958 = vmatprep.subr.bf16.mxu0 0
        %1959 = vmatpush1.bf16.msra.mxu0 0
        %1960 = vmatprep.subr.bf16.mxu0 0
        %1961 = vmatpush1.bf16.msra.mxu0 0
        %1962 = vmatprep.subr.bf16.mxu0 0
        %1963 = vmatpush1.bf16.msra.mxu0 0
        %1964 = vmatprep.mubr.bf16.mxu0 0
        %1965 = vmatmul.mubr.bf16.gmra.mrb[0].mxu0 %v1926
        %v1966 = vpop.f32.mrb[0].mxu0
        %v1967 = vadd.f32 0.0, %v1966
        %v1968 = vpop.f32.mrb[0].mxu0
        %v1969 = vpop.f32.mrb[0].mxu0
        %v1970 = vpop.f32.mrb[0].mxu0
        %1971 = vdwg.mxu0
        %v1973 = vsel %vm1688, %v1918, 0
        %v1976 = vsel %vm1928, %v1922, 0
        %1978 = vmatprep.subr.bf16.mxu0 0
        %1979 = vmatpush1.bf16.msra.mxu0 %v1976
        %1980 = vmatprep.subr.bf16.mxu0 0
        %1981 = vmatpush1.bf16.msra.mxu0 0
        %1982 = vmatprep.subr.bf16.mxu0 0
        %1983 = vmatpush1.bf16.msra.mxu0 0
        %1984 = vmatprep.subr.bf16.mxu0 0
        %1985 = vmatpush1.bf16.msra.mxu0 0
        %1986 = vmatprep.subr.bf16.mxu0 0
        %1987 = vmatpush1.bf16.msra.mxu0 0
        %1988 = vmatprep.subr.bf16.mxu0 0
        %1989 = vmatpush1.bf16.msra.mxu0 0
        %1990 = vmatprep.subr.bf16.mxu0 0
        %1991 = vmatpush1.bf16.msra.mxu0 0
        %1992 = vmatprep.subr.bf16.mxu0 0
        %1993 = vmatpush1.bf16.msra.mxu0 0
        %1994 = vmatprep.subr.bf16.mxu0 0
        %1995 = vmatpush1.bf16.msra.mxu0 0
        %1996 = vmatprep.subr.bf16.mxu0 0
        %1997 = vmatpush1.bf16.msra.mxu0 0
        %1998 = vmatprep.subr.bf16.mxu0 0
        %1999 = vmatpush1.bf16.msra.mxu0 0
        %2000 = vmatprep.subr.bf16.mxu0 0
        %2001 = vmatpush1.bf16.msra.mxu0 0
        %2002 = vmatprep.subr.bf16.mxu0 0
        %2003 = vmatpush1.bf16.msra.mxu0 0
        %2004 = vmatprep.subr.bf16.mxu0 0
        %2005 = vmatpush1.bf16.msra.mxu0 0
        %2006 = vmatprep.subr.bf16.mxu0 0
        %2007 = vmatpush1.bf16.msra.mxu0 0
        %2008 = vmatprep.subr.bf16.mxu0 0
        %2009 = vmatpush1.bf16.msra.mxu0 0
        %2010 = vmatprep.mubr.bf16.mxu0 0
        %2011 = vmatmul.mubr.bf16.gmra.mrb[0].mxu0 %v1973
        %v2012 = vpop.f32.mrb[0].mxu0
        %v2013 = vadd.f32 0.0, %v2012
        %v2014 = vpop.f32.mrb[0].mxu0
        %v2015 = vpop.f32.mrb[0].mxu0
        %v2016 = vpop.f32.mrb[0].mxu0
        %2017 = vdwg.mxu0
        %v2019 = vsel %vm1688, %v1919, 0
        %v2022 = vsel %vm1928, %v1923, 0
        %2024 = vmatprep.subr.bf16.mxu0 0
        %2025 = vmatpush1.bf16.msra.mxu0 %v2022
        %2026 = vmatprep.subr.bf16.mxu0 0
        %2027 = vmatpush1.bf16.msra.mxu0 0
        %2028 = vmatprep.subr.bf16.mxu0 0
        %2029 = vmatpush1.bf16.msra.mxu0 0
        %2030 = vmatprep.subr.bf16.mxu0 0
        %2031 = vmatpush1.bf16.msra.mxu0 0
        %2032 = vmatprep.subr.bf16.mxu0 0
        %2033 = vmatpush1.bf16.msra.mxu0 0
        %2034 = vmatprep.subr.bf16.mxu0 0
        %2035 = vmatpush1.bf16.msra.mxu0 0
        %2036 = vmatprep.subr.bf16.mxu0 0
        %2037 = vmatpush1.bf16.msra.mxu0 0
        %2038 = vmatprep.subr.bf16.mxu0 0
        %2039 = vmatpush1.bf16.msra.mxu0 0
        %2040 = vmatprep.subr.bf16.mxu0 0
        %2041 = vmatpush1.bf16.msra.mxu0 0
        %2042 = vmatprep.subr.bf16.mxu0 0
        %2043 = vmatpush1.bf16.msra.mxu0 0
        %2044 = vmatprep.subr.bf16.mxu0 0
        %2045 = vmatpush1.bf16.msra.mxu0 0
        %2046 = vmatprep.subr.bf16.mxu0 0
        %2047 = vmatpush1.bf16.msra.mxu0 0
        %2048 = vmatprep.subr.bf16.mxu0 0
        %2049 = vmatpush1.bf16.msra.mxu0 0
        %2050 = vmatprep.subr.bf16.mxu0 0
        %2051 = vmatpush1.bf16.msra.mxu0 0
        %2052 = vmatprep.subr.bf16.mxu0 0
        %2053 = vmatpush1.bf16.msra.mxu0 0
        %2054 = vmatprep.subr.bf16.mxu0 0
        %2055 = vmatpush1.bf16.msra.mxu0 0
        %2056 = vmatprep.mubr.bf16.mxu0 0
        %2057 = vmatmul.mubr.bf16.gmra.mrb[0].mxu0 %v2019
        %v2058 = vpop.f32.mrb[0].mxu0
        %v2059 = vadd.f32 0.0, %v2058
        %v2060 = vpop.f32.mrb[0].mxu0
        %v2061 = vpop.f32.mrb[0].mxu0
        %v2062 = vpop.f32.mrb[0].mxu0
        %2063 = vdwg.mxu0
        %v2065 = vsel %vm1688, %v1920, 0
        %v2068 = vsel %vm1928, %v1924, 0
        %2070 = vmatprep.subr.bf16.mxu0 0
        %2071 = vmatpush1.bf16.msra.mxu0 %v2068
        %2072 = vmatprep.subr.bf16.mxu0 0
        %2073 = vmatpush1.bf16.msra.mxu0 0
        %2074 = vmatprep.subr.bf16.mxu0 0
        %2075 = vmatpush1.bf16.msra.mxu0 0
        %2076 = vmatprep.subr.bf16.mxu0 0
        %2077 = vmatpush1.bf16.msra.mxu0 0
        %2078 = vmatprep.subr.bf16.mxu0 0
        %2079 = vmatpush1.bf16.msra.mxu0 0
        %2080 = vmatprep.subr.bf16.mxu0 0
        %2081 = vmatpush1.bf16.msra.mxu0 0
        %2082 = vmatprep.subr.bf16.mxu0 0
        %2083 = vmatpush1.bf16.msra.mxu0 0
        %2084 = vmatprep.subr.bf16.mxu0 0
        %2085 = vmatpush1.bf16.msra.mxu0 0
        %2086 = vmatprep.subr.bf16.mxu0 0
        %2087 = vmatpush1.bf16.msra.mxu0 0
        %2088 = vmatprep.subr.bf16.mxu0 0
        %2089 = vmatpush1.bf16.msra.mxu0 0
        %2090 = vmatprep.subr.bf16.mxu0 0
        %2091 = vmatpush1.bf16.msra.mxu0 0
        %2092 = vmatprep.subr.bf16.mxu0 0
        %2093 = vmatpush1.bf16.msra.mxu0 0
        %2094 = vmatprep.subr.bf16.mxu0 0
        %2095 = vmatpush1.bf16.msra.mxu0 0
        %2096 = vmatprep.subr.bf16.mxu0 0
        %2097 = vmatpush1.bf16.msra.mxu0 0
        %2098 = vmatprep.subr.bf16.mxu0 0
        %2099 = vmatpush1.bf16.msra.mxu0 0
        %2100 = vmatprep.subr.bf16.mxu0 0
        %2101 = vmatpush1.bf16.msra.mxu0 0
        %2102 = vmatprep.mubr.bf16.mxu0 0
        %2103 = vmatmul.mubr.bf16.gmra.mrb[0].mxu0 %v2065
        %v2104 = vpop.f32.mrb[0].mxu0
        %v2105 = vadd.f32 0.0, %v2104
        %v2106 = vpop.f32.mrb[0].mxu0
        %v2107 = vpop.f32.mrb[0].mxu0
        %v2108 = vpop.f32.mrb[0].mxu0
        %2109 = vdwg.mxu0
        %2111 = vrot.lane.b32.xlu0 %v2013, 8
        %v2112 = vpop.permute.xlu0 %2111
        %2115 = vrot.lane.b32.xlu0 %v2059, 16
        %v2116 = vpop.permute.xlu0 %2115
        %2119 = vrot.lane.b32.xlu0 %v2105, 24
        %v2120 = vpop.permute.xlu0 %2119
        %v2122 = vsel %vm1688, %v1967, %v2112
        %vm2123 = vcmask 130048
        %v2124 = vsel %vm2123, %v2122, %v2116
        %vm2125 = vcmask 195584
        %v2126 = vsel %vm2125, %v2124, %v2120
        %v2127 = vpack.c.bf16 %v2126, %v2126
        %v2128 = vld [vmem:[%s10] sm:$0xf]
        %v2129 = vld [vmem:[%s10 + $0x4] sm:$0xf]
        %v2130 = vld [vmem:[%s10 + $0x8] sm:$0xf]
        %v2131 = vld [vmem:[%s10 + $0xc] sm:$0xf]
        %v2132 = vld [vmem:[%s11] sm:$0x1]
        %v2134 = vlaneseq
        %v2135 = vshrl.u32 %v2134, 7
        %v2136 = vsub.s32 0, %v2135
        %v2137 = vrot.slane %v2132, %v2136
        %v2143 = vunpack.c.l.b16 %v2128
        %v2144 = vunpack.c.l.b16 %v2129
        %v2145 = vunpack.c.l.b16 %v2130
        %v2146 = vunpack.c.l.b16 %v2131
        %v2147 = vpack.c.b16 %v2144, %v2143
        %v2148 = vpack.c.b16 %v2146, %v2145
        %v2152 = vsel %vm549, %v2127, 0
        %2154 = vmatprep.subr.bf16.mxu0 0
        %2155 = vmatpush1.bf16.msra.mxu0 %v2147
        %2156 = vmatprep.subr.bf16.mxu0 0
        %2157 = vmatpush1.bf16.msra.mxu0 %v2148
        %2158 = vmatprep.subr.bf16.mxu0 0
        %2159 = vmatpush1.bf16.msra.mxu0 0
        %2160 = vmatprep.subr.bf16.mxu0 0
        %2161 = vmatpush1.bf16.msra.mxu0 0
        %2162 = vmatprep.subr.bf16.mxu0 0
        %2163 = vmatpush1.bf16.msra.mxu0 0
        %2164 = vmatprep.subr.bf16.mxu0 0
        %2165 = vmatpush1.bf16.msra.mxu0 0
        %2166 = vmatprep.subr.bf16.mxu0 0
        %2167 = vmatpush1.bf16.msra.mxu0 0
        %2168 = vmatprep.subr.bf16.mxu0 0
        %2169 = vmatpush1.bf16.msra.mxu0 0
        %2170 = vmatprep.subr.bf16.mxu0 0
        %2171 = vmatpush1.bf16.msra.mxu0 0
        %2172 = vmatprep.subr.bf16.mxu0 0
        %2173 = vmatpush1.bf16.msra.mxu0 0
        %2174 = vmatprep.subr.bf16.mxu0 0
        %2175 = vmatpush1.bf16.msra.mxu0 0
        %2176 = vmatprep.subr.bf16.mxu0 0
        %2177 = vmatpush1.bf16.msra.mxu0 0
        %2178 = vmatprep.subr.bf16.mxu0 0
        %2179 = vmatpush1.bf16.msra.mxu0 0
        %2180 = vmatprep.subr.bf16.mxu0 0
        %2181 = vmatpush1.bf16.msra.mxu0 0
        %2182 = vmatprep.subr.bf16.mxu0 0
        %2183 = vmatpush1.bf16.msra.mxu0 0
        %2184 = vmatprep.subr.bf16.mxu0 0
        %2185 = vmatpush1.bf16.msra.mxu0 0
        %2186 = vmatprep.mubr.bf16.mxu0 0
        %2187 = vmatmul.mubr.bf16.gmra.mrb[0].mxu0 %v2152
        %v2188 = vpop.f32.mrb[0].mxu0
        %v2189 = vadd.f32 %v2137, %v2188
        %v2190 = vpop.f32.mrb[0].mxu0
        %v2191 = vpop.f32.mrb[0].mxu0
        %v2192 = vpop.f32.mrb[0].mxu0
        %2193 = vdwg.mxu0
        %v2194 = vmul.f32 %v712, %v2189
        %v2195 = vadd.f32 %v518, %v2194
        %v2196 = vsel %vm549, %v2195, 0.0
        %2197 = vadd.xlane.f32.xlu0 %v2196
        %v2198 = vpop.xlane.xlu0 %2197
        %v2199 = vmul.f32 %v2198, %v906
        %v2200 = vsub.f32 %v2195, %v2199
        %v2201 = vmul.f32 %v2200, %v2200
        %v2202 = vsel %vm549, %v2201, 0.0
        %2203 = vadd.xlane.f32.xlu0 %v2202
        %v2204 = vpop.xlane.xlu0 %2203
        %v2205 = vmul.f32 %v2204, %v906
        %v2206 = vadd.f32 %v2205, 1e-06
        %v2207 = vrsqrt.pop %v2206
        %v2208 = vmul.f32 %v2200, %v2207
        %v2209 = vadd.f32 %v836, 1.0
        %v2210 = vmul.f32 %v2208, %v2209
        %v2211 = vadd.f32 %v2210, %v774
        %v2212 = vpack.c.bf16 %v2211, %v2211
        %v2213 = vld [vmem:[%s12] sm:$0xf]
        %v2214 = vld [vmem:[%s12 + $0x4] sm:$0xf]
        %v2215 = vld [vmem:[%s12 + $0x8] sm:$0xf]
        %v2216 = vld [vmem:[%s12 + $0xc] sm:$0xf]
        %v2217 = vld [vmem:[%s13] sm:$0x1]
        %v2219 = vlaneseq
        %v2220 = vshrl.u32 %v2219, 7
        %v2221 = vsub.s32 0, %v2220
        %v2222 = vrot.slane %v2217, %v2221
        %v2228 = vunpack.c.l.b16 %v2213
        %v2229 = vunpack.c.l.b16 %v2214
        %v2230 = vunpack.c.l.b16 %v2215
        %v2231 = vunpack.c.l.b16 %v2216
        %v2232 = vpack.c.b16 %v2229, %v2228
        %v2233 = vpack.c.b16 %v2231, %v2230
        %v2237 = vsel %vm549, %v2212, 0
        %2239 = vmatprep.subr.bf16.mxu0 0
        %2240 = vmatpush1.bf16.msra.mxu0 %v2232
        %2241 = vmatprep.subr.bf16.mxu0 0
        %2242 = vmatpush1.bf16.msra.mxu0 %v2233
        %2243 = vmatprep.subr.bf16.mxu0 0
        %2244 = vmatpush1.bf16.msra.mxu0 0
        %2245 = vmatprep.subr.bf16.mxu0 0
        %2246 = vmatpush1.bf16.msra.mxu0 0
        %2247 = vmatprep.subr.bf16.mxu0 0
        %2248 = vmatpush1.bf16.msra.mxu0 0
        %2249 = vmatprep.subr.bf16.mxu0 0
        %2250 = vmatpush1.bf16.msra.mxu0 0
        %2251 = vmatprep.subr.bf16.mxu0 0
        %2252 = vmatpush1.bf16.msra.mxu0 0
        %2253 = vmatprep.subr.bf16.mxu0 0
        %2254 = vmatpush1.bf16.msra.mxu0 0
        %2255 = vmatprep.subr.bf16.mxu0 0
        %2256 = vmatpush1.bf16.msra.mxu0 0
        %2257 = vmatprep.subr.bf16.mxu0 0
        %2258 = vmatpush1.bf16.msra.mxu0 0
        %2259 = vmatprep.subr.bf16.mxu0 0
        %2260 = vmatpush1.bf16.msra.mxu0 0
        %2261 = vmatprep.subr.bf16.mxu0 0
        %2262 = vmatpush1.bf16.msra.mxu0 0
        %2263 = vmatprep.subr.bf16.mxu0 0
        %2264 = vmatpush1.bf16.msra.mxu0 0
        %2265 = vmatprep.subr.bf16.mxu0 0
        %2266 = vmatpush1.bf16.msra.mxu0 0
        %2267 = vmatprep.subr.bf16.mxu0 0
        %2268 = vmatpush1.bf16.msra.mxu0 0
        %2269 = vmatprep.subr.bf16.mxu0 0
        %2270 = vmatpush1.bf16.msra.mxu0 0
        %2271 = vmatprep.mubr.bf16.mxu0 0
        %2272 = vmatmul.mubr.bf16.gmra.mrb[0].mxu0 %v2237
        %v2273 = vpop.f32.mrb[0].mxu0
        %v2274 = vadd.f32 %v2222, %v2273
        %v2275 = vpop.f32.mrb[0].mxu0
        %v2276 = vpop.f32.mrb[0].mxu0
        %v2277 = vpop.f32.mrb[0].mxu0
        %2278 = vdwg.mxu0
        %v2279 = vmul.f32 %v2274, 0.5
        %v2280 = vmul.f32 %v2274, 0.044715
        %v2281 = vmul.f32 %v2280, %v2274
        %v2282 = vmul.f32 %v2281, %v2274
        %v2283 = vadd.f32 %v2274, %v2282
        %v2284 = vmul.f32 %v2283, 0.7978846
        %v2285 = vtanh.pop %v2284
        %v2286 = vadd.f32 %v2285, 1.0
        %v2287 = vmul.f32 %v2279, %v2286
        %v2288 = vpack.c.bf16 %v2287, %v2287
        %v2289 = vld [vmem:[%s14] sm:$0xf]
        %v2290 = vld [vmem:[%s14 + $0x4] sm:$0xf]
        %v2291 = vld [vmem:[%s14 + $0x8] sm:$0xf]
        %v2292 = vld [vmem:[%s14 + $0xc] sm:$0xf]
        %v2293 = vld [vmem:[%s14 + $0x10] sm:$0xf]
        %v2294 = vld [vmem:[%s14 + $0x14] sm:$0xf]
        %v2295 = vld [vmem:[%s14 + $0x18] sm:$0xf]
        %v2296 = vld [vmem:[%s14 + $0x1c] sm:$0xf]
        %v2297 = vld [vmem:[%s14 + $0x20] sm:$0xf]
        %v2298 = vld [vmem:[%s14 + $0x24] sm:$0xf]
        %v2299 = vld [vmem:[%s14 + $0x28] sm:$0xf]
        %v2300 = vld [vmem:[%s14 + $0x2c] sm:$0xf]
        %v2301 = vld [vmem:[%s14 + $0x30] sm:$0xf]
        %v2302 = vld [vmem:[%s14 + $0x34] sm:$0xf]
        %v2303 = vld [vmem:[%s14 + $0x38] sm:$0xf]
        %v2304 = vld [vmem:[%s14 + $0x3c] sm:$0xf]
        %v2305 = vld [vmem:[%s15] sm:$0x1]
        %v2307 = vlaneseq
        %v2308 = vshrl.u32 %v2307, 7
        %v2309 = vsub.s32 0, %v2308
        %v2310 = vrot.slane %v2305, %v2309
        %v2328 = vunpack.c.l.b16 %v2289
        %v2329 = vunpack.c.l.b16 %v2290
        %v2330 = vunpack.c.l.b16 %v2291
        %v2331 = vunpack.c.l.b16 %v2292
        %v2332 = vunpack.c.l.b16 %v2293
        %v2333 = vunpack.c.l.b16 %v2294
        %v2334 = vunpack.c.l.b16 %v2295
        %v2335 = vunpack.c.l.b16 %v2296
        %v2336 = vunpack.c.l.b16 %v2297
        %v2337 = vunpack.c.l.b16 %v2298
        %v2338 = vunpack.c.l.b16 %v2299
        %v2339 = vunpack.c.l.b16 %v2300
        %v2340 = vunpack.c.l.b16 %v2301
        %v2341 = vunpack.c.l.b16 %v2302
        %v2342 = vunpack.c.l.b16 %v2303
        %v2343 = vunpack.c.l.b16 %v2304
        %v2344 = vpack.c.b16 %v2329, %v2328
        %v2345 = vpack.c.b16 %v2331, %v2330
        %v2346 = vpack.c.b16 %v2333, %v2332
        %v2347 = vpack.c.b16 %v2335, %v2334
        %v2348 = vpack.c.b16 %v2337, %v2336
        %v2349 = vpack.c.b16 %v2339, %v2338
        %v2350 = vpack.c.b16 %v2341, %v2340
        %v2351 = vpack.c.b16 %v2343, %v2342
        %2360 = vmatprep.subr.bf16.mxu0 0
        %2361 = vmatpush1.bf16.msra.mxu0 %v2344
        %2362 = vmatprep.subr.bf16.mxu0 0
        %2363 = vmatpush1.bf16.msra.mxu0 %v2345
        %2364 = vmatprep.subr.bf16.mxu0 0
        %2365 = vmatpush1.bf16.msra.mxu0 %v2346
        %2366 = vmatprep.subr.bf16.mxu0 0
        %2367 = vmatpush1.bf16.msra.mxu0 %v2347
        %2368 = vmatprep.subr.bf16.mxu0 0
        %2369 = vmatpush1.bf16.msra.mxu0 %v2348
        %2370 = vmatprep.subr.bf16.mxu0 0
        %2371 = vmatpush1.bf16.msra.mxu0 %v2349
        %2372 = vmatprep.subr.bf16.mxu0 0
        %2373 = vmatpush1.bf16.msra.mxu0 %v2350
        %2374 = vmatprep.subr.bf16.mxu0 0
        %2375 = vmatpush1.bf16.msra.mxu0 %v2351
        %2376 = vmatprep.subr.bf16.mxu0 0
        %2377 = vmatpush1.bf16.msra.mxu0 0
        %2378 = vmatprep.subr.bf16.mxu0 0
        %2379 = vmatpush1.bf16.msra.mxu0 0
        %2380 = vmatprep.subr.bf16.mxu0 0
        %2381 = vmatpush1.bf16.msra.mxu0 0
        %2382 = vmatprep.subr.bf16.mxu0 0
        %2383 = vmatpush1.bf16.msra.mxu0 0
        %2384 = vmatprep.subr.bf16.mxu0 0
        %2385 = vmatpush1.bf16.msra.mxu0 0
        %2386 = vmatprep.subr.bf16.mxu0 0
        %2387 = vmatpush1.bf16.msra.mxu0 0
        %2388 = vmatprep.subr.bf16.mxu0 0
        %2389 = vmatpush1.bf16.msra.mxu0 0
        %2390 = vmatprep.subr.bf16.mxu0 0
        %2391 = vmatpush1.bf16.msra.mxu0 0
        %2392 = vmatprep.mubr.bf16.mxu0 0
        %2393 = vmatmul.mubr.bf16.gmra.mrb[0].mxu0 %v2288
        %v2394 = vpop.f32.mrb[0].mxu0
        %v2395 = vadd.f32 %v2310, %v2394
        %v2396 = vpop.f32.mrb[0].mxu0
        %v2397 = vpop.f32.mrb[0].mxu0
        %v2398 = vpop.f32.mrb[0].mxu0
        %2399 = vdwg.mxu0
        %v2400 = vmul.f32 %v898, %v2395
        %v2401 = vadd.f32 %v2195, %v2400
        %2402 = vst.msk [vmem:[%s512] sm:$0xff] %vm549, %v2401
        %s2403 = sand.u32 %s379, 1
        %s2404 = scalar_lea.sflag [#allocation3], %s2403
        %s2405 = sand.u32 %s379, 1
        %s2406 = smul.addr %s2405, 8
        %s2407 = scalar_lea.vmem [#allocation2], %s2406
        // Predicated region
        $region85: #{tpu_custom_call.1} parent=83 // pred_check
          %p2408 = pneg %p389
        $region86: #{tpu_custom_call.1} parent=83 // pred_check_branch
          %2410 = sbr.rel (%p2408) target = $region88
        $region87: #{tpu_custom_call.1} parent=83 // pred_region
          %s2412 = ssub.s32 128, 128
          %2413 = vsyncadd %s2404, %s2412
          %s2414 = smul.addr %s30, 128
          %s2415 = scalar_lea.hbm %s16, %s2414
          %s2417 = sshll.u32 %s2407, 4
          %s2418 = int_to_ptr.vmem [resolvable:$true] %s2417
          %2420 = dma.vmem_to_hbm [thread:$0]  %s2418, 128, %s2415, %s2404
        $region88: #{tpu_custom_call.1} parent=83 // pred_fallthru
          _
      $region84: #{tpu_custom_call.1} parent=5 // pred_fallthru
        _
      %p2421 = scmp.le.s32.totalorder 2, %s25
      // Predicated region
      $region89: #{tpu_custom_call.1} parent=5 // pred_check
        %p2422 = pneg %p2421
      $region90: #{tpu_custom_call.1} parent=5 // pred_check_branch
        %2424 = sbr.rel (%p2422) target = $region92
      $region91: #{tpu_custom_call.1} parent=5 // pred_region
        %s2425 = ssub.s32 %s25, 2
        // Predicated region
        $region93: #{tpu_custom_call.1} parent=91 // pred_check
          %p2426 = pneg %p395
        $region94: #{tpu_custom_call.1} parent=91 // pred_check_branch
          %2428 = sbr.rel (%p2426) target = $region96
        $region95: #{tpu_custom_call.1} parent=91 // pred_region
          %s2429 = sand.u32 %s380, 1
          %s2430 = scalar_lea.sflag [#allocation3], %s2429
          %s2431 = sand.u32 %s380, 1
          %s2432 = smul.addr %s2431, 8
          %s2433 = scalar_lea.vmem [#allocation2], %s2432
          %2434 = dma.done %s2430, 128
        $region96: #{tpu_custom_call.1} parent=91 // pred_fallthru
          _
      $region92: #{tpu_custom_call.1} parent=5 // pred_fallthru
        _
    $region6: #{tpu_custom_call.1} parent=1 // loop_footer
      %s29 = sadd.s32 1, %s25
    $region7: #{tpu_custom_call.1} parent=1 // loop_footer_branch
      %24 = sbr.rel target = $region3
    $region8: #{tpu_custom_call.1} parent=1 // loop_exit
      _
    %2435 = vsyncpa [#allocation3], 1
    %s2436 = scalar_lea.sflag [#allocation3], 1
    %2437 = vsyncpa %s2436, 1

</llo_original>
